<compile_context>
chip_gen: v6e
topology: v6e:2x2x1
jax: 0.10.0
libtpu: 0.0.40
codegen_flags: <defaults>
</compile_context>

<pallas_src>
import math

import jax
import jax.numpy as jnp
import numpy as np
from jax import lax
from jax.experimental import pallas as pl
from jax.experimental.pallas import tpu as pltpu

# ---------------- model hyper-parameters (mirror the PyTorch __init__) -------------
VOCAB_SIZE = 50
EMBED_DIM = 16          # conv spatial length
NUM_CLASSES = 3
OUT_CHANNELS = 8
KERNEL_SIZE = 3
STRIDE = 1
PADDING = 1
DROPOUT_P = 0.5         # TODO(synk): dropout treated as identity (eval / inference mode)
C_IN = 1000             # Conv1d in_channels == fixed sequence length 1000
BATCH = 2

E_PAD = EMBED_DIM + 2 * PADDING                                 # padded conv spatial length (18)
L_OUT = (E_PAD - KERNEL_SIZE) // STRIDE + 1                     # Conv1d output length (16)
L_POOL = (L_OUT - KERNEL_SIZE) // STRIDE + 1                    # MaxPool1d output length (14)
# L_POOL plays the role of get_correct_input_dim(...) (the CSV lookup), computed analytically.
# NOTE: the PyTorch module passes stride=stride to MaxPool1d explicitly, so pool stride == STRIDE.

KOC = KERNEL_SIZE * OUT_CHANNELS                                # 24
C_PAD = 1024            # contraction dim padded to whole 128-lane vregs
V_PAD = 64              # vocab padded (one-hot sublane extent)
E_SUB = 24              # E_PAD (=18) rounded up to a multiple of 8 sublanes
C_CHUNK = 256           # one-hot built/consumed in 256-lane chunks (bounds vreg pressure)

assert STRIDE == 1, "in-kernel shift-and-add slicing below assumes stride == 1"


# ------------------------------- Pallas kernel -------------------------------------
def cnn_fixed_len_kernel(tok_ref, w2_ref, embt_ref, bc_ref, wl_ref, bl_ref, out_ref):
    # tok_ref : (B, C_PAD)   int32  tokens (padded channel positions hit zero rows of w2)
    # w2_ref  : (C_PAD, KOC) f32    conv weight, W[oc, c, k] -> w2[c, k*OC + oc]; rows >= C_IN are 0
    # embt_ref: (E_SUB, V_PAD) f32  padded/transposed embedding: embt[e, v] = E[v, e - PADDING]
    # bc_ref  : (1, OC)             conv bias
    # wl_ref  : (NC, L_POOL)        linear weight (native PyTorch layout)
    # bl_ref  : (NC, 1)             linear bias
    # out_ref : (B, NC, OC)         kernel-native output layout
    embt = embt_ref[...]
    bc = bc_ref[...]
    wl = wl_ref[...]
    bl = bl_ref[...]
    # one-hot row-index (vocab id) pattern, shared by every chunk and batch (hoisted)
    v_iota = lax.broadcasted_iota(jnp.int32, (V_PAD, C_CHUNK), 0)

    for b in range(BATCH):                      # static, BATCH = 2
        # --- embedding gather + Conv1d channel contraction, as MXU matmuls ---
        # u[v, k*OC+oc] = sum_{c : tok[b,c] == v} W[oc, c, k]
        u = jnp.zeros((V_PAD, KOC), jnp.float32)
        for c0 in range(0, C_PAD, C_CHUNK):     # 4 chunks of 256 channels
            tok_c = tok_ref[b:b + 1, c0:c0 + C_CHUNK]              # (1, C_CHUNK) int32
            oh_c = jnp.where(v_iota == tok_c, 1.0, 0.0)            # (V_PAD, C_CHUNK) one-hot^T
            u = u + jnp.dot(oh_c, w2_ref[c0:c0 + C_CHUNK, :],
                            preferred_element_type=jnp.float32)    # (V_PAD, KOC)
        # z[e, k*OC+oc] = sum_c emb_pad[tok[b,c], e] * W[oc, c, k]  (e = padded spatial axis)
        z = jnp.dot(embt, u, preferred_element_type=jnp.float32)   # (E_SUB, KOC)

        # --- Conv1d K-tap shift-and-add + bias + ReLU (all in vregs) ---
        conv = z[0:L_OUT, 0:OUT_CHANNELS]
        for k in range(1, KERNEL_SIZE):
            conv = conv + z[k:k + L_OUT, k * OUT_CHANNELS:(k + 1) * OUT_CHANNELS]
        conv = jnp.maximum(conv + bc, 0.0)                          # (L_OUT, OC)

        # --- MaxPool1d(kernel_size=K, stride=STRIDE) over shifted views ---
        pool = conv[0:L_POOL]
        for k in range(1, KERNEL_SIZE):
            pool = jnp.maximum(pool, conv[k:k + L_POOL])            # (L_POOL, OC)

        # --- Linear + sigmoid (dropout = identity in eval) ---
        o = jnp.dot(wl, pool, preferred_element_type=jnp.float32) + bl   # (NC, OC)
        out_ref[b] = pl.reciprocal(1.0 + jnp.exp(-o), approx=True)       # sigmoid via EUP


def cnn_fixed_len_forward(x_tokens, lengths, params):
    """Mirrors CNN_fixed_len.forward(x, l); `lengths` is unused (as in the PyTorch model)."""
    del lengths
    # ---- parameter-only reshapes (tiny; no activation-sized HBM round trips) ----
    w2 = jnp.transpose(params["conv_w"], (1, 2, 0)).reshape(C_IN, KOC)    # w2[c, k*OC+oc] = W[oc,c,k]
    w2 = jnp.pad(w2, ((0, C_PAD - C_IN), (0, 0)))                         # zero rows: padded c -> 0
    embt = jnp.zeros((E_SUB, V_PAD), jnp.float32)
    embt = embt.at[PADDING:PADDING + EMBED_DIM, :VOCAB_SIZE].set(params["embedding"].T)
    bc = params["conv_b"].reshape(1, OUT_CHANNELS)
    wl = params["lin_w"]                                                  # (NC, L_POOL)
    bl = params["lin_b"].reshape(NUM_CLASSES, 1)
    tok = jnp.pad(x_tokens.astype(jnp.int32), ((0, 0), (0, C_PAD - C_IN)))  # (B, C_PAD)

    out_bno = pl.pallas_call(
        cnn_fixed_len_kernel,
        out_shape=jax.ShapeDtypeStruct((BATCH, NUM_CLASSES, OUT_CHANNELS), jnp.float32),
        in_specs=[pl.BlockSpec(memory_space=pltpu.MemorySpace.VMEM)] * 6,
        out_specs=pl.BlockSpec(memory_space=pltpu.MemorySpace.VMEM),
    )(tok, w2, embt, bc, wl, bl)

    out = jnp.transpose(out_bno, (0, 2, 1))                  # (B, OC, NC) -- PyTorch layout
    return jnp.squeeze(out)                                  # matches out.squeeze()


# ------------------------------ pure-JAX reference ----------------------------------
def reference_forward(x_tokens, params):
    emb = params["embedding"][x_tokens]                      # (B, C_IN, E)
    xp = jnp.pad(emb, ((0, 0), (0, 0), (PADDING, PADDING)))  # pad spatial (last) axis
    cols = jnp.stack([xp[:, :, t * STRIDE: t * STRIDE + KERNEL_SIZE]
                      for t in range(L_OUT)], axis=1)        # (B, L_OUT, C_IN, K)
    conv = jnp.einsum("btck,ock->bot", cols, params["conv_w"]) \
        + params["conv_b"][None, :, None]                    # (B, OC, L_OUT)
    conv = jnp.maximum(conv, 0.0)
    pooled = jnp.stack([jnp.max(conv[:, :, p * STRIDE: p * STRIDE + KERNEL_SIZE], axis=-1)
                        for p in range(L_POOL)], axis=-1)    # (B, OC, L_POOL)
    out = jnp.einsum("bop,np->bon", pooled, params["lin_w"]) + params["lin_b"][None, None, :]
    return jnp.squeeze(jax.nn.sigmoid(out))


# -------------------------------------- main ----------------------------------------
if __name__ == "__main__":
    key = jax.random.PRNGKey(0)
    k_emb, k_cw, k_cb, k_lw, k_lb, k_x = jax.random.split(key, 6)

    embedding = jax.random.normal(k_emb, (VOCAB_SIZE, EMBED_DIM), jnp.float32) * 0.1
    embedding = embedding.at[0].set(0.0)                     # padding_idx=0
    conv_w = jax.random.normal(k_cw, (OUT_CHANNELS, C_IN, KERNEL_SIZE), jnp.float32) \
        * (1.0 / math.sqrt(C_IN * KERNEL_SIZE))
    conv_b = jax.random.normal(k_cb, (OUT_CHANNELS,), jnp.float32) * 0.01
    lin_w = jax.random.normal(k_lw, (NUM_CLASSES, L_POOL), jnp.float32) \
        * (1.0 / math.sqrt(L_POOL))
    lin_b = jax.random.normal(k_lb, (NUM_CLASSES,), jnp.float32) * 0.01

    params = {"embedding": embedding, "conv_w": conv_w, "conv_b": conv_b,
              "lin_w": lin_w, "lin_b": lin_b}

    x = jax.random.randint(k_x, (BATCH, C_IN), 0, VOCAB_SIZE, dtype=jnp.int32)
    lengths = jnp.full((BATCH,), C_IN, dtype=jnp.int32)      # unused, mirrors forward(x, l)

    forward = jax.jit(cnn_fixed_len_forward)                 # fuse param prep + kernel launch
    out = jax.block_until_ready(forward(x, lengths, params))

    ref = jax.block_until_ready(reference_forward(x, params))
    np.testing.assert_allclose(np.asarray(out), np.asarray(ref), rtol=5e-3, atol=5e-3)

    print("KERNEL_OK")
</pallas_src>

<mosaic_0001>
module attributes {stable_mosaic.version = 11 : i64} {
  func.func @cnn_fixed_len_kernel(%arg0: memref<2x1024xi32, #tpu.memory_space<vmem>>, %arg1: memref<1024x24xf32, #tpu.memory_space<vmem>>, %arg2: memref<24x64xf32, #tpu.memory_space<vmem>>, %arg3: memref<1x8xf32, #tpu.memory_space<vmem>>, %arg4: memref<3x14xf32, #tpu.memory_space<vmem>>, %arg5: memref<3x1xf32, #tpu.memory_space<vmem>>, %arg6: memref<2x3x8xf32, #tpu.memory_space<vmem>>) attributes {dimension_semantics = [], scalar_prefetch = 0 : i64, scratch_operands = 0 : i64, tpu.core_type = #tpu.core_type<tc>} {
    %c0 = arith.constant 0 : index
    %c0_0 = arith.constant 0 : index
    %0 = vector.load %arg2[%c0, %c0_0] : memref<24x64xf32, #tpu.memory_space<vmem>>, vector<24x64xf32>
    %c0_1 = arith.constant 0 : index
    %c0_2 = arith.constant 0 : index
    %1 = vector.load %arg3[%c0_1, %c0_2] : memref<1x8xf32, #tpu.memory_space<vmem>>, vector<1x8xf32>
    %c0_3 = arith.constant 0 : index
    %c0_4 = arith.constant 0 : index
    %2 = vector.load %arg4[%c0_3, %c0_4] : memref<3x14xf32, #tpu.memory_space<vmem>>, vector<3x14xf32>
    %c0_5 = arith.constant 0 : index
    %c0_6 = arith.constant 0 : index
    %3 = vector.load %arg5[%c0_5, %c0_6] : memref<3x1xf32, #tpu.memory_space<vmem>>, vector<3x1xf32>
    %4 = tpu.iota {dimensions = array<i32: 0>} : vector<64x256xi32>
    %cst = arith.constant 0.000000e+00 : f32
    %5 = vector.broadcast %cst : f32 to vector<64x24xf32>
    %c0_7 = arith.constant 0 : index
    %c0_8 = arith.constant 0 : index
    %6 = vector.load %arg0[%c0_7, %c0_8] : memref<2x1024xi32, #tpu.memory_space<vmem>>, vector<1x256xi32>
    %7 = vector.broadcast %6 : vector<1x256xi32> to vector<64x256xi32>
    %8 = arith.cmpi eq, %4, %7 : vector<64x256xi32>
    %cst_9 = arith.constant 1.000000e+00 : f32
    %cst_10 = arith.constant 0.000000e+00 : f32
    %9 = vector.broadcast %cst_9 : f32 to vector<64x256xf32>
    %10 = vector.broadcast %cst_10 : f32 to vector<64x256xf32>
    %11 = arith.select %8, %9, %10 : vector<64x256xi1>, vector<64x256xf32>
    %c0_11 = arith.constant 0 : index
    %c0_12 = arith.constant 0 : index
    %12 = vector.load %arg1[%c0_11, %c0_12] : memref<1024x24xf32, #tpu.memory_space<vmem>>, vector<256x24xf32>
    %cst_13 = arith.constant dense<0.000000e+00> : vector<64x24xf32>
    %13 = tpu.matmul %11, %12, %cst_13 {dimension_numbers = #tpu.dot_dimension_numbers<[1], [0], [0], [1], [0, 0, 1, 1], [], []>} : vector<64x256xf32>, vector<256x24xf32>, vector<64x24xf32> -> vector<64x24xf32>
    %14 = arith.addf %5, %13 : vector<64x24xf32>
    %c0_14 = arith.constant 0 : index
    %c256 = arith.constant 256 : index
    %15 = vector.load %arg0[%c0_14, %c256] : memref<2x1024xi32, #tpu.memory_space<vmem>>, vector<1x256xi32>
    %16 = vector.broadcast %15 : vector<1x256xi32> to vector<64x256xi32>
    %17 = arith.cmpi eq, %4, %16 : vector<64x256xi32>
    %cst_15 = arith.constant 1.000000e+00 : f32
    %cst_16 = arith.constant 0.000000e+00 : f32
    %18 = vector.broadcast %cst_15 : f32 to vector<64x256xf32>
    %19 = vector.broadcast %cst_16 : f32 to vector<64x256xf32>
    %20 = arith.select %17, %18, %19 : vector<64x256xi1>, vector<64x256xf32>
    %c256_17 = arith.constant 256 : index
    %c0_18 = arith.constant 0 : index
    %21 = vector.load %arg1[%c256_17, %c0_18] : memref<1024x24xf32, #tpu.memory_space<vmem>>, vector<256x24xf32>
    %cst_19 = arith.constant dense<0.000000e+00> : vector<64x24xf32>
    %22 = tpu.matmul %20, %21, %cst_19 {dimension_numbers = #tpu.dot_dimension_numbers<[1], [0], [0], [1], [0, 0, 1, 1], [], []>} : vector<64x256xf32>, vector<256x24xf32>, vector<64x24xf32> -> vector<64x24xf32>
    %23 = arith.addf %14, %22 : vector<64x24xf32>
    %c0_20 = arith.constant 0 : index
    %c512 = arith.constant 512 : index
    %24 = vector.load %arg0[%c0_20, %c512] : memref<2x1024xi32, #tpu.memory_space<vmem>>, vector<1x256xi32>
    %25 = vector.broadcast %24 : vector<1x256xi32> to vector<64x256xi32>
    %26 = arith.cmpi eq, %4, %25 : vector<64x256xi32>
    %cst_21 = arith.constant 1.000000e+00 : f32
    %cst_22 = arith.constant 0.000000e+00 : f32
    %27 = vector.broadcast %cst_21 : f32 to vector<64x256xf32>
    %28 = vector.broadcast %cst_22 : f32 to vector<64x256xf32>
    %29 = arith.select %26, %27, %28 : vector<64x256xi1>, vector<64x256xf32>
    %c512_23 = arith.constant 512 : index
    %c0_24 = arith.constant 0 : index
    %30 = vector.load %arg1[%c512_23, %c0_24] : memref<1024x24xf32, #tpu.memory_space<vmem>>, vector<256x24xf32>
    %cst_25 = arith.constant dense<0.000000e+00> : vector<64x24xf32>
    %31 = tpu.matmul %29, %30, %cst_25 {dimension_numbers = #tpu.dot_dimension_numbers<[1], [0], [0], [1], [0, 0, 1, 1], [], []>} : vector<64x256xf32>, vector<256x24xf32>, vector<64x24xf32> -> vector<64x24xf32>
    %32 = arith.addf %23, %31 : vector<64x24xf32>
    %c0_26 = arith.constant 0 : index
    %c768 = arith.constant 768 : index
    %33 = vector.load %arg0[%c0_26, %c768] : memref<2x1024xi32, #tpu.memory_space<vmem>>, vector<1x256xi32>
    %34 = vector.broadcast %33 : vector<1x256xi32> to vector<64x256xi32>
    %35 = arith.cmpi eq, %4, %34 : vector<64x256xi32>
    %cst_27 = arith.constant 1.000000e+00 : f32
    %cst_28 = arith.constant 0.000000e+00 : f32
    %36 = vector.broadcast %cst_27 : f32 to vector<64x256xf32>
    %37 = vector.broadcast %cst_28 : f32 to vector<64x256xf32>
    %38 = arith.select %35, %36, %37 : vector<64x256xi1>, vector<64x256xf32>
    %c768_29 = arith.constant 768 : index
    %c0_30 = arith.constant 0 : index
    %39 = vector.load %arg1[%c768_29, %c0_30] : memref<1024x24xf32, #tpu.memory_space<vmem>>, vector<256x24xf32>
    %cst_31 = arith.constant dense<0.000000e+00> : vector<64x24xf32>
    %40 = tpu.matmul %38, %39, %cst_31 {dimension_numbers = #tpu.dot_dimension_numbers<[1], [0], [0], [1], [0, 0, 1, 1], [], []>} : vector<64x256xf32>, vector<256x24xf32>, vector<64x24xf32> -> vector<64x24xf32>
    %41 = arith.addf %32, %40 : vector<64x24xf32>
    %cst_32 = arith.constant dense<0.000000e+00> : vector<24x24xf32>
    %42 = tpu.matmul %0, %41, %cst_32 {dimension_numbers = #tpu.dot_dimension_numbers<[1], [0], [0], [1], [0, 0, 1, 1], [], []>} : vector<24x64xf32>, vector<64x24xf32>, vector<24x24xf32> -> vector<24x24xf32>
    %43 = vector.extract_strided_slice %42 {offsets = [0, 0], sizes = [16, 8], strides = [1, 1]} : vector<24x24xf32> to vector<16x8xf32>
    %44 = vector.extract_strided_slice %42 {offsets = [1, 8], sizes = [16, 8], strides = [1, 1]} : vector<24x24xf32> to vector<16x8xf32>
    %45 = arith.addf %43, %44 : vector<16x8xf32>
    %46 = vector.extract_strided_slice %42 {offsets = [2, 16], sizes = [16, 8], strides = [1, 1]} : vector<24x24xf32> to vector<16x8xf32>
    %47 = arith.addf %45, %46 : vector<16x8xf32>
    %48 = vector.broadcast %1 : vector<1x8xf32> to vector<16x8xf32>
    %49 = arith.addf %47, %48 : vector<16x8xf32>
    %cst_33 = arith.constant 0.000000e+00 : f32
    %50 = vector.broadcast %cst_33 : f32 to vector<16x8xf32>
    %51 = arith.maximumf %49, %50 : vector<16x8xf32>
    %52 = vector.extract_strided_slice %51 {offsets = [0, 0], sizes = [14, 8], strides = [1, 1]} : vector<16x8xf32> to vector<14x8xf32>
    %53 = vector.extract_strided_slice %51 {offsets = [1, 0], sizes = [14, 8], strides = [1, 1]} : vector<16x8xf32> to vector<14x8xf32>
    %54 = arith.maximumf %52, %53 : vector<14x8xf32>
    %55 = vector.extract_strided_slice %51 {offsets = [2, 0], sizes = [14, 8], strides = [1, 1]} : vector<16x8xf32> to vector<14x8xf32>
    %56 = arith.maximumf %54, %55 : vector<14x8xf32>
    %cst_34 = arith.constant dense<0.000000e+00> : vector<3x8xf32>
    %57 = tpu.matmul %2, %56, %cst_34 {dimension_numbers = #tpu.dot_dimension_numbers<[1], [0], [0], [1], [0, 0, 1, 1], [], []>} : vector<3x14xf32>, vector<14x8xf32>, vector<3x8xf32> -> vector<3x8xf32>
    %58 = vector.broadcast %3 : vector<3x1xf32> to vector<3x8xf32>
    %59 = arith.addf %57, %58 : vector<3x8xf32>
    %cst_35 = arith.constant 0.000000e+00 : f32
    %60 = vector.broadcast %cst_35 : f32 to vector<3x8xf32>
    %61 = arith.subf %60, %59 : vector<3x8xf32>
    %62 = math.exp %61 : vector<3x8xf32>
    %cst_36 = arith.constant 1.000000e+00 : f32
    %63 = vector.broadcast %cst_36 : f32 to vector<3x8xf32>
    %64 = arith.addf %63, %62 : vector<3x8xf32>
    %65 = tpu.reciprocal %64 {approx = true} : vector<3x8xf32> -> vector<3x8xf32>
    %c0_37 = arith.constant 0 : index
    %c0_38 = arith.constant 0 : index
    %c0_39 = arith.constant 0 : index
    %66 = vector.load %arg6[%c0_37, %c0_38, %c0_39] : memref<2x3x8xf32, #tpu.memory_space<vmem>>, vector<1x3x8xf32>
    %67 = vector.shape_cast %66 : vector<1x3x8xf32> to vector<3x8xf32>
    %68 = vector.shape_cast %65 : vector<3x8xf32> to vector<1x3x8xf32>
    tpu.vector_store %arg6[%c0_37, %c0_38, %c0_39], %68 {strides = array<i32>} : memref<2x3x8xf32, #tpu.memory_space<vmem>>, vector<1x3x8xf32>,
    %cst_40 = arith.constant 0.000000e+00 : f32
    %69 = vector.broadcast %cst_40 : f32 to vector<64x24xf32>
    %c1 = arith.constant 1 : index
    %c0_41 = arith.constant 0 : index
    %70 = vector.load %arg0[%c1, %c0_41] : memref<2x1024xi32, #tpu.memory_space<vmem>>, vector<1x256xi32>
    %71 = vector.broadcast %70 : vector<1x256xi32> to vector<64x256xi32>
    %72 = arith.cmpi eq, %4, %71 : vector<64x256xi32>
    %cst_42 = arith.constant 1.000000e+00 : f32
    %cst_43 = arith.constant 0.000000e+00 : f32
    %73 = vector.broadcast %cst_42 : f32 to vector<64x256xf32>
    %74 = vector.broadcast %cst_43 : f32 to vector<64x256xf32>
    %75 = arith.select %72, %73, %74 : vector<64x256xi1>, vector<64x256xf32>
    %c0_44 = arith.constant 0 : index
    %c0_45 = arith.constant 0 : index
    %76 = vector.load %arg1[%c0_44, %c0_45] : memref<1024x24xf32, #tpu.memory_space<vmem>>, vector<256x24xf32>
    %cst_46 = arith.constant dense<0.000000e+00> : vector<64x24xf32>
    %77 = tpu.matmul %75, %76, %cst_46 {dimension_numbers = #tpu.dot_dimension_numbers<[1], [0], [0], [1], [0, 0, 1, 1], [], []>} : vector<64x256xf32>, vector<256x24xf32>, vector<64x24xf32> -> vector<64x24xf32>
    %78 = arith.addf %69, %77 : vector<64x24xf32>
    %c1_47 = arith.constant 1 : index
    %c256_48 = arith.constant 256 : index
    %79 = vector.load %arg0[%c1_47, %c256_48] : memref<2x1024xi32, #tpu.memory_space<vmem>>, vector<1x256xi32>
    %80 = vector.broadcast %79 : vector<1x256xi32> to vector<64x256xi32>
    %81 = arith.cmpi eq, %4, %80 : vector<64x256xi32>
    %cst_49 = arith.constant 1.000000e+00 : f32
    %cst_50 = arith.constant 0.000000e+00 : f32
    %82 = vector.broadcast %cst_49 : f32 to vector<64x256xf32>
    %83 = vector.broadcast %cst_50 : f32 to vector<64x256xf32>
    %84 = arith.select %81, %82, %83 : vector<64x256xi1>, vector<64x256xf32>
    %c256_51 = arith.constant 256 : index
    %c0_52 = arith.constant 0 : index
    %85 = vector.load %arg1[%c256_51, %c0_52] : memref<1024x24xf32, #tpu.memory_space<vmem>>, vector<256x24xf32>
    %cst_53 = arith.constant dense<0.000000e+00> : vector<64x24xf32>
    %86 = tpu.matmul %84, %85, %cst_53 {dimension_numbers = #tpu.dot_dimension_numbers<[1], [0], [0], [1], [0, 0, 1, 1], [], []>} : vector<64x256xf32>, vector<256x24xf32>, vector<64x24xf32> -> vector<64x24xf32>
    %87 = arith.addf %78, %86 : vector<64x24xf32>
    %c1_54 = arith.constant 1 : index
    %c512_55 = arith.constant 512 : index
    %88 = vector.load %arg0[%c1_54, %c512_55] : memref<2x1024xi32, #tpu.memory_space<vmem>>, vector<1x256xi32>
    %89 = vector.broadcast %88 : vector<1x256xi32> to vector<64x256xi32>
    %90 = arith.cmpi eq, %4, %89 : vector<64x256xi32>
    %cst_56 = arith.constant 1.000000e+00 : f32
    %cst_57 = arith.constant 0.000000e+00 : f32
    %91 = vector.broadcast %cst_56 : f32 to vector<64x256xf32>
    %92 = vector.broadcast %cst_57 : f32 to vector<64x256xf32>
    %93 = arith.select %90, %91, %92 : vector<64x256xi1>, vector<64x256xf32>
    %c512_58 = arith.constant 512 : index
    %c0_59 = arith.constant 0 : index
    %94 = vector.load %arg1[%c512_58, %c0_59] : memref<1024x24xf32, #tpu.memory_space<vmem>>, vector<256x24xf32>
    %cst_60 = arith.constant dense<0.000000e+00> : vector<64x24xf32>
    %95 = tpu.matmul %93, %94, %cst_60 {dimension_numbers = #tpu.dot_dimension_numbers<[1], [0], [0], [1], [0, 0, 1, 1], [], []>} : vector<64x256xf32>, vector<256x24xf32>, vector<64x24xf32> -> vector<64x24xf32>
    %96 = arith.addf %87, %95 : vector<64x24xf32>
    %c1_61 = arith.constant 1 : index
    %c768_62 = arith.constant 768 : index
    %97 = vector.load %arg0[%c1_61, %c768_62] : memref<2x1024xi32, #tpu.memory_space<vmem>>, vector<1x256xi32>
    %98 = vector.broadcast %97 : vector<1x256xi32> to vector<64x256xi32>
    %99 = arith.cmpi eq, %4, %98 : vector<64x256xi32>
    %cst_63 = arith.constant 1.000000e+00 : f32
    %cst_64 = arith.constant 0.000000e+00 : f32
    %100 = vector.broadcast %cst_63 : f32 to vector<64x256xf32>
    %101 = vector.broadcast %cst_64 : f32 to vector<64x256xf32>
    %102 = arith.select %99, %100, %101 : vector<64x256xi1>, vector<64x256xf32>
    %c768_65 = arith.constant 768 : index
    %c0_66 = arith.constant 0 : index
    %103 = vector.load %arg1[%c768_65, %c0_66] : memref<1024x24xf32, #tpu.memory_space<vmem>>, vector<256x24xf32>
    %cst_67 = arith.constant dense<0.000000e+00> : vector<64x24xf32>
    %104 = tpu.matmul %102, %103, %cst_67 {dimension_numbers = #tpu.dot_dimension_numbers<[1], [0], [0], [1], [0, 0, 1, 1], [], []>} : vector<64x256xf32>, vector<256x24xf32>, vector<64x24xf32> -> vector<64x24xf32>
    %105 = arith.addf %96, %104 : vector<64x24xf32>
    %cst_68 = arith.constant dense<0.000000e+00> : vector<24x24xf32>
    %106 = tpu.matmul %0, %105, %cst_68 {dimension_numbers = #tpu.dot_dimension_numbers<[1], [0], [0], [1], [0, 0, 1, 1], [], []>} : vector<24x64xf32>, vector<64x24xf32>, vector<24x24xf32> -> vector<24x24xf32>
    %107 = vector.extract_strided_slice %106 {offsets = [0, 0], sizes = [16, 8], strides = [1, 1]} : vector<24x24xf32> to vector<16x8xf32>
    %108 = vector.extract_strided_slice %106 {offsets = [1, 8], sizes = [16, 8], strides = [1, 1]} : vector<24x24xf32> to vector<16x8xf32>
    %109 = arith.addf %107, %108 : vector<16x8xf32>
    %110 = vector.extract_strided_slice %106 {offsets = [2, 16], sizes = [16, 8], strides = [1, 1]} : vector<24x24xf32> to vector<16x8xf32>
    %111 = arith.addf %109, %110 : vector<16x8xf32>
    %112 = vector.broadcast %1 : vector<1x8xf32> to vector<16x8xf32>
    %113 = arith.addf %111, %112 : vector<16x8xf32>
    %cst_69 = arith.constant 0.000000e+00 : f32
    %114 = vector.broadcast %cst_69 : f32 to vector<16x8xf32>
    %115 = arith.maximumf %113, %114 : vector<16x8xf32>
    %116 = vector.extract_strided_slice %115 {offsets = [0, 0], sizes = [14, 8], strides = [1, 1]} : vector<16x8xf32> to vector<14x8xf32>
    %117 = vector.extract_strided_slice %115 {offsets = [1, 0], sizes = [14, 8], strides = [1, 1]} : vector<16x8xf32> to vector<14x8xf32>
    %118 = arith.maximumf %116, %117 : vector<14x8xf32>
    %119 = vector.extract_strided_slice %115 {offsets = [2, 0], sizes = [14, 8], strides = [1, 1]} : vector<16x8xf32> to vector<14x8xf32>
    %120 = arith.maximumf %118, %119 : vector<14x8xf32>
    %cst_70 = arith.constant dense<0.000000e+00> : vector<3x8xf32>
    %121 = tpu.matmul %2, %120, %cst_70 {dimension_numbers = #tpu.dot_dimension_numbers<[1], [0], [0], [1], [0, 0, 1, 1], [], []>} : vector<3x14xf32>, vector<14x8xf32>, vector<3x8xf32> -> vector<3x8xf32>
    %122 = vector.broadcast %3 : vector<3x1xf32> to vector<3x8xf32>
    %123 = arith.addf %121, %122 : vector<3x8xf32>
    %cst_71 = arith.constant 0.000000e+00 : f32
    %124 = vector.broadcast %cst_71 : f32 to vector<3x8xf32>
    %125 = arith.subf %124, %123 : vector<3x8xf32>
    %126 = math.exp %125 : vector<3x8xf32>
    %cst_72 = arith.constant 1.000000e+00 : f32
    %127 = vector.broadcast %cst_72 : f32 to vector<3x8xf32>
    %128 = arith.addf %127, %126 : vector<3x8xf32>
    %129 = tpu.reciprocal %128 {approx = true} : vector<3x8xf32> -> vector<3x8xf32>
    %c1_73 = arith.constant 1 : index
    %c0_74 = arith.constant 0 : index
    %c0_75 = arith.constant 0 : index
    %130 = vector.load %arg6[%c1_73, %c0_74, %c0_75] : memref<2x3x8xf32, #tpu.memory_space<vmem>>, vector<1x3x8xf32>
    %131 = vector.shape_cast %130 : vector<1x3x8xf32> to vector<3x8xf32>
    %132 = vector.shape_cast %129 : vector<3x8xf32> to vector<1x3x8xf32>
    tpu.vector_store %arg6[%c1_73, %c0_74, %c0_75], %132 {strides = array<i32>} : memref<2x3x8xf32, #tpu.memory_space<vmem>>, vector<1x3x8xf32>,
    return
  }
}

</mosaic_0001>

<llo_original>
// kernel: cnn_fixed_len_forward.1
$region0: #{cnn_fixed_len_forward.1}
  #allocation0 [shape = 'u32[]', space=smem, size = 0x4, offset = 0x4, fixed_abs, tag = 'smem constant byte address 0x4 - core index']
  #allocation1 [shape = 'u32[144,128]{1,0:T(1,128)}', space=vmem, size = 0x12000, scoped, tag = 'internal scratch']
  %s0 = inlined_call_operand.vmem [shape: s32[2,1024], index: 0, kind: input, shape index: {}]
  %s1 = inlined_call_operand.vmem [shape: f32[1024,24], index: 1, kind: input, shape index: {}]
  %s2 = inlined_call_operand.vmem [shape: f32[24,64], index: 2, kind: input, shape index: {}]
  %s3 = inlined_call_operand.vmem [shape: f32[1,8], index: 3, kind: input, shape index: {}]
  %s4 = inlined_call_operand.vmem [shape: f32[3,14], index: 4, kind: input, shape index: {}]
  %s5 = inlined_call_operand.vmem [shape: f32[3,1], index: 5, kind: input, shape index: {}]
  %s6 = inlined_call_operand.vmem [shape: f32[2,3,8], index: 6, kind: output, shape index: {}]
  %s7 = sld [smem:[#allocation0]]
  $region34: #{cnn_fixed_len_forward.1} parent=0
    _
  %s9 = ssub.s32 1, %s7
  %s10 = scalar_select 0, %s9, %s7
  // Predicated region
  $region2: #{cnn_fixed_len_forward.1} parent=0 // pred_check
    _
  $region3: #{cnn_fixed_len_forward.1} parent=0 // pred_check_branch
    %12 = sbr.rel (0) target = $region5
  $region4: #{cnn_fixed_len_forward.1} parent=0 // pred_region
    _
  $region5: #{cnn_fixed_len_forward.1} parent=0 // pred_fallthru
    _
  // Predicated region
  $region6: #{cnn_fixed_len_forward.1} parent=0 // pred_check
    _
  $region7: #{cnn_fixed_len_forward.1} parent=0 // pred_check_branch
    %14 = sbr.rel (0) target = $region9
  $region8: #{cnn_fixed_len_forward.1} parent=0 // pred_region
    _
  $region9: #{cnn_fixed_len_forward.1} parent=0 // pred_fallthru
    _
  // Predicated region
  $region10: #{cnn_fixed_len_forward.1} parent=0 // pred_check
    _
  $region11: #{cnn_fixed_len_forward.1} parent=0 // pred_check_branch
    %16 = sbr.rel (0) target = $region13
  $region12: #{cnn_fixed_len_forward.1} parent=0 // pred_region
    _
  $region13: #{cnn_fixed_len_forward.1} parent=0 // pred_fallthru
    _
  // Predicated region
  $region14: #{cnn_fixed_len_forward.1} parent=0 // pred_check
    _
  $region15: #{cnn_fixed_len_forward.1} parent=0 // pred_check_branch
    %18 = sbr.rel (0) target = $region17
  $region16: #{cnn_fixed_len_forward.1} parent=0 // pred_region
    _
  $region17: #{cnn_fixed_len_forward.1} parent=0 // pred_fallthru
    _
  // Predicated region
  $region18: #{cnn_fixed_len_forward.1} parent=0 // pred_check
    _
  $region19: #{cnn_fixed_len_forward.1} parent=0 // pred_check_branch
    %20 = sbr.rel (0) target = $region21
  $region20: #{cnn_fixed_len_forward.1} parent=0 // pred_region
    _
  $region21: #{cnn_fixed_len_forward.1} parent=0 // pred_fallthru
    _
  // Predicated region
  $region22: #{cnn_fixed_len_forward.1} parent=0 // pred_check
    _
  $region23: #{cnn_fixed_len_forward.1} parent=0 // pred_check_branch
    %22 = sbr.rel (0) target = $region25
  $region24: #{cnn_fixed_len_forward.1} parent=0 // pred_region
    _
  $region25: #{cnn_fixed_len_forward.1} parent=0 // pred_fallthru
    _
  %v23 = vld [vmem:[%s2] sm:$0xff]
  %v24 = vld [vmem:[%s2 + $0x8] sm:$0xff]
  %v25 = vld [vmem:[%s2 + $0x10] sm:$0xff]
  %v26 = vld [vmem:[%s3] sm:$0x1]
  %v27 = vld [vmem:[%s4] sm:$0x7]
  %v28 = vld [vmem:[%s5] sm:$0x7]
  %v29 = vlaneseq
  %v30 = vshrl.u32 %v29, 7
  %v31 = vadd.s32 %v30, 8
  %v32 = vadd.s32 %v30, 16
  %v33 = vadd.s32 %v30, 24
  %v34 = vadd.s32 %v30, 32
  %v35 = vadd.s32 %v30, 40
  %v36 = vadd.s32 %v30, 48
  %v37 = vadd.s32 %v30, 56
  %v38 = vld [vmem:[%s0] ss:$2 sm:$0x3]
  %v39 = vlaneseq
  %v40 = vshrl.u32 %v39, 7
  %v41 = vsub.s32 0, %v40
  %v42 = vrot.slane %v38, %v41
  %v43 = vlaneseq
  %v44 = vshrl.u32 %v43, 7
  %v45 = vsub.s32 1, %v44
  %v46 = vrot.slane %v38, %v45
  %vm47 = vcmp.eq.s32.totalorder %v30, %v42
  %vm48 = vcmp.eq.s32.totalorder %v30, %v46
  %vm49 = vcmp.eq.s32.totalorder %v31, %v42
  %vm50 = vcmp.eq.s32.totalorder %v31, %v46
  %vm51 = vcmp.eq.s32.totalorder %v32, %v42
  %vm52 = vcmp.eq.s32.totalorder %v32, %v46
  %vm53 = vcmp.eq.s32.totalorder %v33, %v42
  %vm54 = vcmp.eq.s32.totalorder %v33, %v46
  %vm55 = vcmp.eq.s32.totalorder %v34, %v42
  %vm56 = vcmp.eq.s32.totalorder %v34, %v46
  %vm57 = vcmp.eq.s32.totalorder %v35, %v42
  %vm58 = vcmp.eq.s32.totalorder %v35, %v46
  %vm59 = vcmp.eq.s32.totalorder %v36, %v42
  %vm60 = vcmp.eq.s32.totalorder %v36, %v46
  %vm61 = vcmp.eq.s32.totalorder %v37, %v42
  %vm62 = vcmp.eq.s32.totalorder %v37, %v46
  %v63 = vsel %vm47, 1.0, 0.0
  %v64 = vsel %vm48, 1.0, 0.0
  %v65 = vsel %vm49, 1.0, 0.0
  %v66 = vsel %vm50, 1.0, 0.0
  %v67 = vsel %vm51, 1.0, 0.0
  %v68 = vsel %vm52, 1.0, 0.0
  %v69 = vsel %vm53, 1.0, 0.0
  %v70 = vsel %vm54, 1.0, 0.0
  %v71 = vsel %vm55, 1.0, 0.0
  %v72 = vsel %vm56, 1.0, 0.0
  %v73 = vsel %vm57, 1.0, 0.0
  %v74 = vsel %vm58, 1.0, 0.0
  %v75 = vsel %vm59, 1.0, 0.0
  %v76 = vsel %vm60, 1.0, 0.0
  %v77 = vsel %vm61, 1.0, 0.0
  %v78 = vsel %vm62, 1.0, 0.0
  %v79 = vld [vmem:[%s1] sm:$0xff]
  %v80 = vld [vmem:[%s1 + $0x8] sm:$0xff]
  %v81 = vld [vmem:[%s1 + $0x10] sm:$0xff]
  %v82 = vld [vmem:[%s1 + $0x18] sm:$0xff]
  %v83 = vld [vmem:[%s1 + $0x20] sm:$0xff]
  %v84 = vld [vmem:[%s1 + $0x28] sm:$0xff]
  %v85 = vld [vmem:[%s1 + $0x30] sm:$0xff]
  %v86 = vld [vmem:[%s1 + $0x38] sm:$0xff]
  %v87 = vld [vmem:[%s1 + $0x40] sm:$0xff]
  %v88 = vld [vmem:[%s1 + $0x48] sm:$0xff]
  %v89 = vld [vmem:[%s1 + $0x50] sm:$0xff]
  %v90 = vld [vmem:[%s1 + $0x58] sm:$0xff]
  %v91 = vld [vmem:[%s1 + $0x60] sm:$0xff]
  %v92 = vld [vmem:[%s1 + $0x68] sm:$0xff]
  %v93 = vld [vmem:[%s1 + $0x70] sm:$0xff]
  %v94 = vld [vmem:[%s1 + $0x78] sm:$0xff]
  %v95 = vld [vmem:[%s1 + $0x80] sm:$0xff]
  %v96 = vld [vmem:[%s1 + $0x88] sm:$0xff]
  %v97 = vld [vmem:[%s1 + $0x90] sm:$0xff]
  %v98 = vld [vmem:[%s1 + $0x98] sm:$0xff]
  %v99 = vld [vmem:[%s1 + $0xa0] sm:$0xff]
  %v100 = vld [vmem:[%s1 + $0xa8] sm:$0xff]
  %v101 = vld [vmem:[%s1 + $0xb0] sm:$0xff]
  %v102 = vld [vmem:[%s1 + $0xb8] sm:$0xff]
  %v103 = vld [vmem:[%s1 + $0xc0] sm:$0xff]
  %v104 = vld [vmem:[%s1 + $0xc8] sm:$0xff]
  %v105 = vld [vmem:[%s1 + $0xd0] sm:$0xff]
  %v106 = vld [vmem:[%s1 + $0xd8] sm:$0xff]
  %v107 = vld [vmem:[%s1 + $0xe0] sm:$0xff]
  %v108 = vld [vmem:[%s1 + $0xe8] sm:$0xff]
  %v109 = vld [vmem:[%s1 + $0xf0] sm:$0xff]
  %v110 = vld [vmem:[%s1 + $0xf8] sm:$0xff]
  %s111 = scalar_lea.vmem %s0, 4
  %v112 = vld [vmem:[%s111] ss:$2 sm:$0x3]
  %v113 = vlaneseq
  %v114 = vshrl.u32 %v113, 7
  %v115 = vsub.s32 0, %v114
  %v116 = vrot.slane %v112, %v115
  %v117 = vlaneseq
  %v118 = vshrl.u32 %v117, 7
  %v119 = vsub.s32 1, %v118
  %v120 = vrot.slane %v112, %v119
  %vm121 = vcmp.eq.s32.totalorder %v30, %v116
  %vm122 = vcmp.eq.s32.totalorder %v30, %v120
  %vm123 = vcmp.eq.s32.totalorder %v31, %v116
  %vm124 = vcmp.eq.s32.totalorder %v31, %v120
  %vm125 = vcmp.eq.s32.totalorder %v32, %v116
  %vm126 = vcmp.eq.s32.totalorder %v32, %v120
  %vm127 = vcmp.eq.s32.totalorder %v33, %v116
  %vm128 = vcmp.eq.s32.totalorder %v33, %v120
  %vm129 = vcmp.eq.s32.totalorder %v34, %v116
  %vm130 = vcmp.eq.s32.totalorder %v34, %v120
  %vm131 = vcmp.eq.s32.totalorder %v35, %v116
  %vm132 = vcmp.eq.s32.totalorder %v35, %v120
  %vm133 = vcmp.eq.s32.totalorder %v36, %v116
  %vm134 = vcmp.eq.s32.totalorder %v36, %v120
  %vm135 = vcmp.eq.s32.totalorder %v37, %v116
  %vm136 = vcmp.eq.s32.totalorder %v37, %v120
  %v137 = vsel %vm121, 1.0, 0.0
  %v138 = vsel %vm122, 1.0, 0.0
  %v139 = vsel %vm123, 1.0, 0.0
  %v140 = vsel %vm124, 1.0, 0.0
  %v141 = vsel %vm125, 1.0, 0.0
  %v142 = vsel %vm126, 1.0, 0.0
  %v143 = vsel %vm127, 1.0, 0.0
  %v144 = vsel %vm128, 1.0, 0.0
  %v145 = vsel %vm129, 1.0, 0.0
  %v146 = vsel %vm130, 1.0, 0.0
  %v147 = vsel %vm131, 1.0, 0.0
  %v148 = vsel %vm132, 1.0, 0.0
  %v149 = vsel %vm133, 1.0, 0.0
  %v150 = vsel %vm134, 1.0, 0.0
  %v151 = vsel %vm135, 1.0, 0.0
  %v152 = vsel %vm136, 1.0, 0.0
  %v153 = vld [vmem:[%s1 + $0x100] sm:$0xff]
  %v154 = vld [vmem:[%s1 + $0x108] sm:$0xff]
  %v155 = vld [vmem:[%s1 + $0x110] sm:$0xff]
  %v156 = vld [vmem:[%s1 + $0x118] sm:$0xff]
  %v157 = vld [vmem:[%s1 + $0x120] sm:$0xff]
  %v158 = vld [vmem:[%s1 + $0x128] sm:$0xff]
  %v159 = vld [vmem:[%s1 + $0x130] sm:$0xff]
  %v160 = vld [vmem:[%s1 + $0x138] sm:$0xff]
  %v161 = vld [vmem:[%s1 + $0x140] sm:$0xff]
  %v162 = vld [vmem:[%s1 + $0x148] sm:$0xff]
  %v163 = vld [vmem:[%s1 + $0x150] sm:$0xff]
  %v164 = vld [vmem:[%s1 + $0x158] sm:$0xff]
  %v165 = vld [vmem:[%s1 + $0x160] sm:$0xff]
  %v166 = vld [vmem:[%s1 + $0x168] sm:$0xff]
  %v167 = vld [vmem:[%s1 + $0x170] sm:$0xff]
  %v168 = vld [vmem:[%s1 + $0x178] sm:$0xff]
  %v169 = vld [vmem:[%s1 + $0x180] sm:$0xff]
  %v170 = vld [vmem:[%s1 + $0x188] sm:$0xff]
  %v171 = vld [vmem:[%s1 + $0x190] sm:$0xff]
  %v172 = vld [vmem:[%s1 + $0x198] sm:$0xff]
  %v173 = vld [vmem:[%s1 + $0x1a0] sm:$0xff]
  %v174 = vld [vmem:[%s1 + $0x1a8] sm:$0xff]
  %v175 = vld [vmem:[%s1 + $0x1b0] sm:$0xff]
  %v176 = vld [vmem:[%s1 + $0x1b8] sm:$0xff]
  %v177 = vld [vmem:[%s1 + $0x1c0] sm:$0xff]
  %v178 = vld [vmem:[%s1 + $0x1c8] sm:$0xff]
  %v179 = vld [vmem:[%s1 + $0x1d0] sm:$0xff]
  %v180 = vld [vmem:[%s1 + $0x1d8] sm:$0xff]
  %v181 = vld [vmem:[%s1 + $0x1e0] sm:$0xff]
  %v182 = vld [vmem:[%s1 + $0x1e8] sm:$0xff]
  %v183 = vld [vmem:[%s1 + $0x1f0] sm:$0xff]
  %v184 = vld [vmem:[%s1 + $0x1f8] sm:$0xff]
  %185 = vmatprep.subr.mxu0 0.0
  %186 = vmatpush1.msra.mxu0 %v168
  %187 = vmatprep.subr.mxu0 0.0
  %188 = vmatpush1.msra.mxu0 %v167
  %189 = vmatprep.subr.mxu0 0.0
  %190 = vmatpush1.msra.mxu0 %v166
  %191 = vmatprep.subr.mxu0 0.0
  %192 = vmatpush1.msra.mxu0 %v165
  %193 = vmatprep.subr.mxu0 0.0
  %194 = vmatpush1.msra.mxu0 %v164
  %195 = vmatprep.subr.mxu0 0.0
  %196 = vmatpush1.msra.mxu0 %v163
  %197 = vmatprep.subr.mxu0 0.0
  %198 = vmatpush1.msra.mxu0 %v162
  %199 = vmatprep.subr.mxu0 0.0
  %200 = vmatpush1.msra.mxu0 %v161
  %201 = vmatprep.subr.mxu0 0.0
  %202 = vmatpush1.msra.mxu0 %v160
  %203 = vmatprep.subr.mxu0 0.0
  %204 = vmatpush1.msra.mxu0 %v159
  %205 = vmatprep.subr.mxu0 0.0
  %206 = vmatpush1.msra.mxu0 %v158
  %207 = vmatprep.subr.mxu0 0.0
  %208 = vmatpush1.msra.mxu0 %v157
  %209 = vmatprep.subr.mxu0 0.0
  %210 = vmatpush1.msra.mxu0 %v156
  %211 = vmatprep.subr.mxu0 0.0
  %212 = vmatpush1.msra.mxu0 %v155
  %213 = vmatprep.subr.mxu0 0.0
  %214 = vmatpush1.msra.mxu0 %v154
  %215 = vmatprep.subr.mxu0 0.0
  %216 = vmatpush1.msra.mxu0 %v153
  %217 = vmatprep.subr.mxu0 0.0
  %218 = vmatpush2.msra.mxu0 %v184
  %219 = vmatprep.subr.mxu0 0.0
  %220 = vmatpush2.msra.mxu0 %v183
  %221 = vmatprep.subr.mxu0 0.0
  %222 = vmatpush2.msra.mxu0 %v182
  %223 = vmatprep.subr.mxu0 0.0
  %224 = vmatpush2.msra.mxu0 %v181
  %225 = vmatprep.subr.mxu0 0.0
  %226 = vmatpush2.msra.mxu0 %v180
  %227 = vmatprep.subr.mxu0 0.0
  %228 = vmatpush2.msra.mxu0 %v179
  %229 = vmatprep.subr.mxu0 0.0
  %230 = vmatpush2.msra.mxu0 %v178
  %231 = vmatprep.subr.mxu0 0.0
  %232 = vmatpush2.msra.mxu0 %v177
  %233 = vmatprep.subr.mxu0 0.0
  %234 = vmatpush2.msra.mxu0 %v176
  %235 = vmatprep.subr.mxu0 0.0
  %236 = vmatpush2.msra.mxu0 %v175
  %237 = vmatprep.subr.mxu0 0.0
  %238 = vmatpush2.msra.mxu0 %v174
  %239 = vmatprep.subr.mxu0 0.0
  %240 = vmatpush2.msra.mxu0 %v173
  %241 = vmatprep.subr.mxu0 0.0
  %242 = vmatpush2.msra.mxu0 %v172
  %243 = vmatprep.subr.mxu0 0.0
  %244 = vmatpush2.msra.mxu0 %v171
  %245 = vmatprep.subr.mxu0 0.0
  %246 = vmatpush2.msra.mxu0 %v170
  %247 = vmatprep.subr.mxu0 0.0
  %248 = vmatpush2.msra.mxu0 %v169
  %249 = vmatprep.mubr.f32.mxu0 %v138
  %250 = vmatmul.mubr.f32.gmra.mxu0 %v137
  %v251 = vpop.f32.mrf.mxu0
  %v252 = vadd.f32 0.0, %v251
  %v253 = vpop.f32.mrf.mxu0
  %254 = vmatprep.mubr.f32.mxu0 %v140
  %255 = vmatmul.mubr.f32.gmra.mxu0 %v139
  %v256 = vpop.f32.mrf.mxu0
  %v257 = vadd.f32 0.0, %v256
  %v258 = vpop.f32.mrf.mxu0
  %259 = vmatprep.mubr.f32.mxu0 %v142
  %260 = vmatmul.mubr.f32.gmra.mxu0 %v141
  %v261 = vpop.f32.mrf.mxu0
  %v262 = vadd.f32 0.0, %v261
  %v263 = vpop.f32.mrf.mxu0
  %264 = vmatprep.mubr.f32.mxu0 %v144
  %265 = vmatmul.mubr.f32.gmra.mxu0 %v143
  %v266 = vpop.f32.mrf.mxu0
  %v267 = vadd.f32 0.0, %v266
  %v268 = vpop.f32.mrf.mxu0
  %269 = vmatprep.mubr.f32.mxu0 %v146
  %270 = vmatmul.mubr.f32.gmra.mxu0 %v145
  %v271 = vpop.f32.mrf.mxu0
  %v272 = vadd.f32 0.0, %v271
  %v273 = vpop.f32.mrf.mxu0
  %274 = vmatprep.mubr.f32.mxu0 %v148
  %275 = vmatmul.mubr.f32.gmra.mxu0 %v147
  %v276 = vpop.f32.mrf.mxu0
  %v277 = vadd.f32 0.0, %v276
  %v278 = vpop.f32.mrf.mxu0
  %279 = vmatprep.mubr.f32.mxu0 %v150
  %280 = vmatmul.mubr.f32.gmra.mxu0 %v149
  %v281 = vpop.f32.mrf.mxu0
  %v282 = vadd.f32 0.0, %v281
  %v283 = vpop.f32.mrf.mxu0
  %284 = vmatprep.mubr.f32.mxu0 %v152
  %285 = vmatmul.mubr.f32.gmra.mxu0 %v151
  %v286 = vpop.f32.mrf.mxu0
  %v287 = vadd.f32 0.0, %v286
  %v288 = vpop.f32.mrf.mxu0
  %289 = vdwg.mxu0
  %290 = vmatprep.subr.mxu0 0.0
  %291 = vmatpush1.msra.mxu0 %v94
  %292 = vmatprep.subr.mxu0 0.0
  %293 = vmatpush1.msra.mxu0 %v93
  %294 = vmatprep.subr.mxu0 0.0
  %295 = vmatpush1.msra.mxu0 %v92
  %296 = vmatprep.subr.mxu0 0.0
  %297 = vmatpush1.msra.mxu0 %v91
  %298 = vmatprep.subr.mxu0 0.0
  %299 = vmatpush1.msra.mxu0 %v90
  %300 = vmatprep.subr.mxu0 0.0
  %301 = vmatpush1.msra.mxu0 %v89
  %302 = vmatprep.subr.mxu0 0.0
  %303 = vmatpush1.msra.mxu0 %v88
  %304 = vmatprep.subr.mxu0 0.0
  %305 = vmatpush1.msra.mxu0 %v87
  %306 = vmatprep.subr.mxu0 0.0
  %307 = vmatpush1.msra.mxu0 %v86
  %308 = vmatprep.subr.mxu0 0.0
  %309 = vmatpush1.msra.mxu0 %v85
  %310 = vmatprep.subr.mxu0 0.0
  %311 = vmatpush1.msra.mxu0 %v84
  %312 = vmatprep.subr.mxu0 0.0
  %313 = vmatpush1.msra.mxu0 %v83
  %314 = vmatprep.subr.mxu0 0.0
  %315 = vmatpush1.msra.mxu0 %v82
  %316 = vmatprep.subr.mxu0 0.0
  %317 = vmatpush1.msra.mxu0 %v81
  %318 = vmatprep.subr.mxu0 0.0
  %319 = vmatpush1.msra.mxu0 %v80
  %320 = vmatprep.subr.mxu0 0.0
  %321 = vmatpush1.msra.mxu0 %v79
  %322 = vmatprep.subr.mxu0 0.0
  %323 = vmatpush2.msra.mxu0 %v110
  %324 = vmatprep.subr.mxu0 0.0
  %325 = vmatpush2.msra.mxu0 %v109
  %326 = vmatprep.subr.mxu0 0.0
  %327 = vmatpush2.msra.mxu0 %v108
  %328 = vmatprep.subr.mxu0 0.0
  %329 = vmatpush2.msra.mxu0 %v107
  %330 = vmatprep.subr.mxu0 0.0
  %331 = vmatpush2.msra.mxu0 %v106
  %332 = vmatprep.subr.mxu0 0.0
  %333 = vmatpush2.msra.mxu0 %v105
  %334 = vmatprep.subr.mxu0 0.0
  %335 = vmatpush2.msra.mxu0 %v104
  %336 = vmatprep.subr.mxu0 0.0
  %337 = vmatpush2.msra.mxu0 %v103
  %338 = vmatprep.subr.mxu0 0.0
  %339 = vmatpush2.msra.mxu0 %v102
  %340 = vmatprep.subr.mxu0 0.0
  %341 = vmatpush2.msra.mxu0 %v101
  %342 = vmatprep.subr.mxu0 0.0
  %343 = vmatpush2.msra.mxu0 %v100
  %344 = vmatprep.subr.mxu0 0.0
  %345 = vmatpush2.msra.mxu0 %v99
  %346 = vmatprep.subr.mxu0 0.0
  %347 = vmatpush2.msra.mxu0 %v98
  %348 = vmatprep.subr.mxu0 0.0
  %349 = vmatpush2.msra.mxu0 %v97
  %350 = vmatprep.subr.mxu0 0.0
  %351 = vmatpush2.msra.mxu0 %v96
  %352 = vmatprep.subr.mxu0 0.0
  %353 = vmatpush2.msra.mxu0 %v95
  %354 = vmatprep.mubr.f32.mxu0 %v64
  %355 = vmatmul.mubr.f32.gmra.mxu0 %v63
  %v356 = vpop.f32.mrf.mxu0
  %v357 = vadd.f32 %v252, %v356
  %v358 = vpop.f32.mrf.mxu0
  %359 = vmatprep.mubr.f32.mxu0 %v66
  %360 = vmatmul.mubr.f32.gmra.mxu0 %v65
  %v361 = vpop.f32.mrf.mxu0
  %v362 = vadd.f32 %v257, %v361
  %v363 = vpop.f32.mrf.mxu0
  %364 = vmatprep.mubr.f32.mxu0 %v68
  %365 = vmatmul.mubr.f32.gmra.mxu0 %v67
  %v366 = vpop.f32.mrf.mxu0
  %v367 = vadd.f32 %v262, %v366
  %v368 = vpop.f32.mrf.mxu0
  %369 = vmatprep.mubr.f32.mxu0 %v70
  %370 = vmatmul.mubr.f32.gmra.mxu0 %v69
  %v371 = vpop.f32.mrf.mxu0
  %v372 = vadd.f32 %v267, %v371
  %v373 = vpop.f32.mrf.mxu0
  %374 = vmatprep.mubr.f32.mxu0 %v72
  %375 = vmatmul.mubr.f32.gmra.mxu0 %v71
  %v376 = vpop.f32.mrf.mxu0
  %v377 = vadd.f32 %v272, %v376
  %v378 = vpop.f32.mrf.mxu0
  %379 = vmatprep.mubr.f32.mxu0 %v74
  %380 = vmatmul.mubr.f32.gmra.mxu0 %v73
  %v381 = vpop.f32.mrf.mxu0
  %v382 = vadd.f32 %v277, %v381
  %v383 = vpop.f32.mrf.mxu0
  %384 = vmatprep.mubr.f32.mxu0 %v76
  %385 = vmatmul.mubr.f32.gmra.mxu0 %v75
  %v386 = vpop.f32.mrf.mxu0
  %v387 = vadd.f32 %v282, %v386
  %v388 = vpop.f32.mrf.mxu0
  %389 = vmatprep.mubr.f32.mxu0 %v78
  %390 = vmatmul.mubr.f32.gmra.mxu0 %v77
  %v391 = vpop.f32.mrf.mxu0
  %v392 = vadd.f32 %v287, %v391
  %v393 = vpop.f32.mrf.mxu0
  %394 = vdwg.mxu0
  %s395 = scalar_lea.vmem %s0, 8
  %v396 = vld [vmem:[%s395] ss:$2 sm:$0x3]
  %v397 = vlaneseq
  %v398 = vshrl.u32 %v397, 7
  %v399 = vsub.s32 0, %v398
  %v400 = vrot.slane %v396, %v399
  %v401 = vlaneseq
  %v402 = vshrl.u32 %v401, 7
  %v403 = vsub.s32 1, %v402
  %v404 = vrot.slane %v396, %v403
  %vm405 = vcmp.eq.s32.totalorder %v30, %v400
  %vm406 = vcmp.eq.s32.totalorder %v30, %v404
  %vm407 = vcmp.eq.s32.totalorder %v31, %v400
  %vm408 = vcmp.eq.s32.totalorder %v31, %v404
  %vm409 = vcmp.eq.s32.totalorder %v32, %v400
  %vm410 = vcmp.eq.s32.totalorder %v32, %v404
  %vm411 = vcmp.eq.s32.totalorder %v33, %v400
  %vm412 = vcmp.eq.s32.totalorder %v33, %v404
  %vm413 = vcmp.eq.s32.totalorder %v34, %v400
  %vm414 = vcmp.eq.s32.totalorder %v34, %v404
  %vm415 = vcmp.eq.s32.totalorder %v35, %v400
  %vm416 = vcmp.eq.s32.totalorder %v35, %v404
  %vm417 = vcmp.eq.s32.totalorder %v36, %v400
  %vm418 = vcmp.eq.s32.totalorder %v36, %v404
  %vm419 = vcmp.eq.s32.totalorder %v37, %v400
  %vm420 = vcmp.eq.s32.totalorder %v37, %v404
  %v421 = vsel %vm405, 1.0, 0.0
  %v422 = vsel %vm406, 1.0, 0.0
  %v423 = vsel %vm407, 1.0, 0.0
  %v424 = vsel %vm408, 1.0, 0.0
  %v425 = vsel %vm409, 1.0, 0.0
  %v426 = vsel %vm410, 1.0, 0.0
  %v427 = vsel %vm411, 1.0, 0.0
  %v428 = vsel %vm412, 1.0, 0.0
  %v429 = vsel %vm413, 1.0, 0.0
  %v430 = vsel %vm414, 1.0, 0.0
  %v431 = vsel %vm415, 1.0, 0.0
  %v432 = vsel %vm416, 1.0, 0.0
  %v433 = vsel %vm417, 1.0, 0.0
  %v434 = vsel %vm418, 1.0, 0.0
  %v435 = vsel %vm419, 1.0, 0.0
  %v436 = vsel %vm420, 1.0, 0.0
  %v437 = vld [vmem:[%s1 + $0x200] sm:$0xff]
  %v438 = vld [vmem:[%s1 + $0x208] sm:$0xff]
  %v439 = vld [vmem:[%s1 + $0x210] sm:$0xff]
  %v440 = vld [vmem:[%s1 + $0x218] sm:$0xff]
  %v441 = vld [vmem:[%s1 + $0x220] sm:$0xff]
  %v442 = vld [vmem:[%s1 + $0x228] sm:$0xff]
  %v443 = vld [vmem:[%s1 + $0x230] sm:$0xff]
  %v444 = vld [vmem:[%s1 + $0x238] sm:$0xff]
  %v445 = vld [vmem:[%s1 + $0x240] sm:$0xff]
  %v446 = vld [vmem:[%s1 + $0x248] sm:$0xff]
  %v447 = vld [vmem:[%s1 + $0x250] sm:$0xff]
  %v448 = vld [vmem:[%s1 + $0x258] sm:$0xff]
  %v449 = vld [vmem:[%s1 + $0x260] sm:$0xff]
  %v450 = vld [vmem:[%s1 + $0x268] sm:$0xff]
  %v451 = vld [vmem:[%s1 + $0x270] sm:$0xff]
  %v452 = vld [vmem:[%s1 + $0x278] sm:$0xff]
  %v453 = vld [vmem:[%s1 + $0x280] sm:$0xff]
  %v454 = vld [vmem:[%s1 + $0x288] sm:$0xff]
  %v455 = vld [vmem:[%s1 + $0x290] sm:$0xff]
  %v456 = vld [vmem:[%s1 + $0x298] sm:$0xff]
  %v457 = vld [vmem:[%s1 + $0x2a0] sm:$0xff]
  %v458 = vld [vmem:[%s1 + $0x2a8] sm:$0xff]
  %v459 = vld [vmem:[%s1 + $0x2b0] sm:$0xff]
  %v460 = vld [vmem:[%s1 + $0x2b8] sm:$0xff]
  %v461 = vld [vmem:[%s1 + $0x2c0] sm:$0xff]
  %v462 = vld [vmem:[%s1 + $0x2c8] sm:$0xff]
  %v463 = vld [vmem:[%s1 + $0x2d0] sm:$0xff]
  %v464 = vld [vmem:[%s1 + $0x2d8] sm:$0xff]
  %v465 = vld [vmem:[%s1 + $0x2e0] sm:$0xff]
  %v466 = vld [vmem:[%s1 + $0x2e8] sm:$0xff]
  %v467 = vld [vmem:[%s1 + $0x2f0] sm:$0xff]
  %v468 = vld [vmem:[%s1 + $0x2f8] sm:$0xff]
  %469 = vmatprep.subr.mxu0 0.0
  %470 = vmatpush1.msra.mxu0 %v452
  %471 = vmatprep.subr.mxu0 0.0
  %472 = vmatpush1.msra.mxu0 %v451
  %473 = vmatprep.subr.mxu0 0.0
  %474 = vmatpush1.msra.mxu0 %v450
  %475 = vmatprep.subr.mxu0 0.0
  %476 = vmatpush1.msra.mxu0 %v449
  %477 = vmatprep.subr.mxu0 0.0
  %478 = vmatpush1.msra.mxu0 %v448
  %479 = vmatprep.subr.mxu0 0.0
  %480 = vmatpush1.msra.mxu0 %v447
  %481 = vmatprep.subr.mxu0 0.0
  %482 = vmatpush1.msra.mxu0 %v446
  %483 = vmatprep.subr.mxu0 0.0
  %484 = vmatpush1.msra.mxu0 %v445
  %485 = vmatprep.subr.mxu0 0.0
  %486 = vmatpush1.msra.mxu0 %v444
  %487 = vmatprep.subr.mxu0 0.0
  %488 = vmatpush1.msra.mxu0 %v443
  %489 = vmatprep.subr.mxu0 0.0
  %490 = vmatpush1.msra.mxu0 %v442
  %491 = vmatprep.subr.mxu0 0.0
  %492 = vmatpush1.msra.mxu0 %v441
  %493 = vmatprep.subr.mxu0 0.0
  %494 = vmatpush1.msra.mxu0 %v440
  %495 = vmatprep.subr.mxu0 0.0
  %496 = vmatpush1.msra.mxu0 %v439
  %497 = vmatprep.subr.mxu0 0.0
  %498 = vmatpush1.msra.mxu0 %v438
  %499 = vmatprep.subr.mxu0 0.0
  %500 = vmatpush1.msra.mxu0 %v437
  %501 = vmatprep.subr.mxu0 0.0
  %502 = vmatpush2.msra.mxu0 %v468
  %503 = vmatprep.subr.mxu0 0.0
  %504 = vmatpush2.msra.mxu0 %v467
  %505 = vmatprep.subr.mxu0 0.0
  %506 = vmatpush2.msra.mxu0 %v466
  %507 = vmatprep.subr.mxu0 0.0
  %508 = vmatpush2.msra.mxu0 %v465
  %509 = vmatprep.subr.mxu0 0.0
  %510 = vmatpush2.msra.mxu0 %v464
  %511 = vmatprep.subr.mxu0 0.0
  %512 = vmatpush2.msra.mxu0 %v463
  %513 = vmatprep.subr.mxu0 0.0
  %514 = vmatpush2.msra.mxu0 %v462
  %515 = vmatprep.subr.mxu0 0.0
  %516 = vmatpush2.msra.mxu0 %v461
  %517 = vmatprep.subr.mxu0 0.0
  %518 = vmatpush2.msra.mxu0 %v460
  %519 = vmatprep.subr.mxu0 0.0
  %520 = vmatpush2.msra.mxu0 %v459
  %521 = vmatprep.subr.mxu0 0.0
  %522 = vmatpush2.msra.mxu0 %v458
  %523 = vmatprep.subr.mxu0 0.0
  %524 = vmatpush2.msra.mxu0 %v457
  %525 = vmatprep.subr.mxu0 0.0
  %526 = vmatpush2.msra.mxu0 %v456
  %527 = vmatprep.subr.mxu0 0.0
  %528 = vmatpush2.msra.mxu0 %v455
  %529 = vmatprep.subr.mxu0 0.0
  %530 = vmatpush2.msra.mxu0 %v454
  %531 = vmatprep.subr.mxu0 0.0
  %532 = vmatpush2.msra.mxu0 %v453
  %533 = vmatprep.mubr.f32.mxu0 %v422
  %534 = vmatmul.mubr.f32.gmra.mxu0 %v421
  %v535 = vpop.f32.mrf.mxu0
  %v536 = vadd.f32 0.0, %v535
  %v537 = vpop.f32.mrf.mxu0
  %538 = vmatprep.mubr.f32.mxu0 %v424
  %539 = vmatmul.mubr.f32.gmra.mxu0 %v423
  %v540 = vpop.f32.mrf.mxu0
  %v541 = vadd.f32 0.0, %v540
  %v542 = vpop.f32.mrf.mxu0
  %543 = vmatprep.mubr.f32.mxu0 %v426
  %544 = vmatmul.mubr.f32.gmra.mxu0 %v425
  %v545 = vpop.f32.mrf.mxu0
  %v546 = vadd.f32 0.0, %v545
  %v547 = vpop.f32.mrf.mxu0
  %548 = vmatprep.mubr.f32.mxu0 %v428
  %549 = vmatmul.mubr.f32.gmra.mxu0 %v427
  %v550 = vpop.f32.mrf.mxu0
  %v551 = vadd.f32 0.0, %v550
  %v552 = vpop.f32.mrf.mxu0
  %553 = vmatprep.mubr.f32.mxu0 %v430
  %554 = vmatmul.mubr.f32.gmra.mxu0 %v429
  %v555 = vpop.f32.mrf.mxu0
  %v556 = vadd.f32 0.0, %v555
  %v557 = vpop.f32.mrf.mxu0
  %558 = vmatprep.mubr.f32.mxu0 %v432
  %559 = vmatmul.mubr.f32.gmra.mxu0 %v431
  %v560 = vpop.f32.mrf.mxu0
  %v561 = vadd.f32 0.0, %v560
  %v562 = vpop.f32.mrf.mxu0
  %563 = vmatprep.mubr.f32.mxu0 %v434
  %564 = vmatmul.mubr.f32.gmra.mxu0 %v433
  %v565 = vpop.f32.mrf.mxu0
  %v566 = vadd.f32 0.0, %v565
  %v567 = vpop.f32.mrf.mxu0
  %568 = vmatprep.mubr.f32.mxu0 %v436
  %569 = vmatmul.mubr.f32.gmra.mxu0 %v435
  %v570 = vpop.f32.mrf.mxu0
  %v571 = vadd.f32 0.0, %v570
  %v572 = vpop.f32.mrf.mxu0
  %573 = vdwg.mxu0
  %v574 = vadd.f32 %v357, %v536
  %v575 = vadd.f32 %v362, %v541
  %v576 = vadd.f32 %v367, %v546
  %v577 = vadd.f32 %v372, %v551
  %v578 = vadd.f32 %v377, %v556
  %v579 = vadd.f32 %v382, %v561
  %v580 = vadd.f32 %v387, %v566
  %v581 = vadd.f32 %v392, %v571
  %s582 = scalar_lea.vmem %s0, 12
  %v583 = vld [vmem:[%s582] ss:$2 sm:$0x3]
  %v584 = vlaneseq
  %v585 = vshrl.u32 %v584, 7
  %v586 = vsub.s32 0, %v585
  %v587 = vrot.slane %v583, %v586
  %v588 = vlaneseq
  %v589 = vshrl.u32 %v588, 7
  %v590 = vsub.s32 1, %v589
  %v591 = vrot.slane %v583, %v590
  %vm592 = vcmp.eq.s32.totalorder %v30, %v587
  %vm593 = vcmp.eq.s32.totalorder %v30, %v591
  %vm594 = vcmp.eq.s32.totalorder %v31, %v587
  %vm595 = vcmp.eq.s32.totalorder %v31, %v591
  %vm596 = vcmp.eq.s32.totalorder %v32, %v587
  %vm597 = vcmp.eq.s32.totalorder %v32, %v591
  %vm598 = vcmp.eq.s32.totalorder %v33, %v587
  %vm599 = vcmp.eq.s32.totalorder %v33, %v591
  %vm600 = vcmp.eq.s32.totalorder %v34, %v587
  %vm601 = vcmp.eq.s32.totalorder %v34, %v591
  %vm602 = vcmp.eq.s32.totalorder %v35, %v587
  %vm603 = vcmp.eq.s32.totalorder %v35, %v591
  %vm604 = vcmp.eq.s32.totalorder %v36, %v587
  %vm605 = vcmp.eq.s32.totalorder %v36, %v591
  %vm606 = vcmp.eq.s32.totalorder %v37, %v587
  %vm607 = vcmp.eq.s32.totalorder %v37, %v591
  %v608 = vsel %vm592, 1.0, 0.0
  %v609 = vsel %vm593, 1.0, 0.0
  %v610 = vsel %vm594, 1.0, 0.0
  %v611 = vsel %vm595, 1.0, 0.0
  %v612 = vsel %vm596, 1.0, 0.0
  %v613 = vsel %vm597, 1.0, 0.0
  %v614 = vsel %vm598, 1.0, 0.0
  %v615 = vsel %vm599, 1.0, 0.0
  %v616 = vsel %vm600, 1.0, 0.0
  %v617 = vsel %vm601, 1.0, 0.0
  %v618 = vsel %vm602, 1.0, 0.0
  %v619 = vsel %vm603, 1.0, 0.0
  %v620 = vsel %vm604, 1.0, 0.0
  %v621 = vsel %vm605, 1.0, 0.0
  %v622 = vsel %vm606, 1.0, 0.0
  %v623 = vsel %vm607, 1.0, 0.0
  %v624 = vld [vmem:[%s1 + $0x300] sm:$0xff]
  %v625 = vld [vmem:[%s1 + $0x308] sm:$0xff]
  %v626 = vld [vmem:[%s1 + $0x310] sm:$0xff]
  %v627 = vld [vmem:[%s1 + $0x318] sm:$0xff]
  %v628 = vld [vmem:[%s1 + $0x320] sm:$0xff]
  %v629 = vld [vmem:[%s1 + $0x328] sm:$0xff]
  %v630 = vld [vmem:[%s1 + $0x330] sm:$0xff]
  %v631 = vld [vmem:[%s1 + $0x338] sm:$0xff]
  %v632 = vld [vmem:[%s1 + $0x340] sm:$0xff]
  %v633 = vld [vmem:[%s1 + $0x348] sm:$0xff]
  %v634 = vld [vmem:[%s1 + $0x350] sm:$0xff]
  %v635 = vld [vmem:[%s1 + $0x358] sm:$0xff]
  %v636 = vld [vmem:[%s1 + $0x360] sm:$0xff]
  %v637 = vld [vmem:[%s1 + $0x368] sm:$0xff]
  %v638 = vld [vmem:[%s1 + $0x370] sm:$0xff]
  %v639 = vld [vmem:[%s1 + $0x378] sm:$0xff]
  %v640 = vld [vmem:[%s1 + $0x380] sm:$0xff]
  %v641 = vld [vmem:[%s1 + $0x388] sm:$0xff]
  %v642 = vld [vmem:[%s1 + $0x390] sm:$0xff]
  %v643 = vld [vmem:[%s1 + $0x398] sm:$0xff]
  %v644 = vld [vmem:[%s1 + $0x3a0] sm:$0xff]
  %v645 = vld [vmem:[%s1 + $0x3a8] sm:$0xff]
  %v646 = vld [vmem:[%s1 + $0x3b0] sm:$0xff]
  %v647 = vld [vmem:[%s1 + $0x3b8] sm:$0xff]
  %v648 = vld [vmem:[%s1 + $0x3c0] sm:$0xff]
  %v649 = vld [vmem:[%s1 + $0x3c8] sm:$0xff]
  %v650 = vld [vmem:[%s1 + $0x3d0] sm:$0xff]
  %v651 = vld [vmem:[%s1 + $0x3d8] sm:$0xff]
  %v652 = vld [vmem:[%s1 + $0x3e0] sm:$0xff]
  %v653 = vld [vmem:[%s1 + $0x3e8] sm:$0xff]
  %v654 = vld [vmem:[%s1 + $0x3f0] sm:$0xff]
  %v655 = vld [vmem:[%s1 + $0x3f8] sm:$0xff]
  %656 = vmatprep.subr.mxu0 0.0
  %657 = vmatpush1.msra.mxu0 %v639
  %658 = vmatprep.subr.mxu0 0.0
  %659 = vmatpush1.msra.mxu0 %v638
  %660 = vmatprep.subr.mxu0 0.0
  %661 = vmatpush1.msra.mxu0 %v637
  %662 = vmatprep.subr.mxu0 0.0
  %663 = vmatpush1.msra.mxu0 %v636
  %664 = vmatprep.subr.mxu0 0.0
  %665 = vmatpush1.msra.mxu0 %v635
  %666 = vmatprep.subr.mxu0 0.0
  %667 = vmatpush1.msra.mxu0 %v634
  %668 = vmatprep.subr.mxu0 0.0
  %669 = vmatpush1.msra.mxu0 %v633
  %670 = vmatprep.subr.mxu0 0.0
  %671 = vmatpush1.msra.mxu0 %v632
  %672 = vmatprep.subr.mxu0 0.0
  %673 = vmatpush1.msra.mxu0 %v631
  %674 = vmatprep.subr.mxu0 0.0
  %675 = vmatpush1.msra.mxu0 %v630
  %676 = vmatprep.subr.mxu0 0.0
  %677 = vmatpush1.msra.mxu0 %v629
  %678 = vmatprep.subr.mxu0 0.0
  %679 = vmatpush1.msra.mxu0 %v628
  %680 = vmatprep.subr.mxu0 0.0
  %681 = vmatpush1.msra.mxu0 %v627
  %682 = vmatprep.subr.mxu0 0.0
  %683 = vmatpush1.msra.mxu0 %v626
  %684 = vmatprep.subr.mxu0 0.0
  %685 = vmatpush1.msra.mxu0 %v625
  %686 = vmatprep.subr.mxu0 0.0
  %687 = vmatpush1.msra.mxu0 %v624
  %688 = vmatprep.subr.mxu0 0.0
  %689 = vmatpush2.msra.mxu0 %v655
  %690 = vmatprep.subr.mxu0 0.0
  %691 = vmatpush2.msra.mxu0 %v654
  %692 = vmatprep.subr.mxu0 0.0
  %693 = vmatpush2.msra.mxu0 %v653
  %694 = vmatprep.subr.mxu0 0.0
  %695 = vmatpush2.msra.mxu0 %v652
  %696 = vmatprep.subr.mxu0 0.0
  %697 = vmatpush2.msra.mxu0 %v651
  %698 = vmatprep.subr.mxu0 0.0
  %699 = vmatpush2.msra.mxu0 %v650
  %700 = vmatprep.subr.mxu0 0.0
  %701 = vmatpush2.msra.mxu0 %v649
  %702 = vmatprep.subr.mxu0 0.0
  %703 = vmatpush2.msra.mxu0 %v648
  %704 = vmatprep.subr.mxu0 0.0
  %705 = vmatpush2.msra.mxu0 %v647
  %706 = vmatprep.subr.mxu0 0.0
  %707 = vmatpush2.msra.mxu0 %v646
  %708 = vmatprep.subr.mxu0 0.0
  %709 = vmatpush2.msra.mxu0 %v645
  %710 = vmatprep.subr.mxu0 0.0
  %711 = vmatpush2.msra.mxu0 %v644
  %712 = vmatprep.subr.mxu0 0.0
  %713 = vmatpush2.msra.mxu0 %v643
  %714 = vmatprep.subr.mxu0 0.0
  %715 = vmatpush2.msra.mxu0 %v642
  %716 = vmatprep.subr.mxu0 0.0
  %717 = vmatpush2.msra.mxu0 %v641
  %718 = vmatprep.subr.mxu0 0.0
  %719 = vmatpush2.msra.mxu0 %v640
  %720 = vmatprep.mubr.f32.mxu0 %v609
  %721 = vmatmul.mubr.f32.gmra.mxu0 %v608
  %v722 = vpop.f32.mrf.mxu0
  %v723 = vadd.f32 0.0, %v722
  %v724 = vpop.f32.mrf.mxu0
  %725 = vmatprep.mubr.f32.mxu0 %v611
  %726 = vmatmul.mubr.f32.gmra.mxu0 %v610
  %v727 = vpop.f32.mrf.mxu0
  %v728 = vadd.f32 0.0, %v727
  %v729 = vpop.f32.mrf.mxu0
  %730 = vmatprep.mubr.f32.mxu0 %v613
  %731 = vmatmul.mubr.f32.gmra.mxu0 %v612
  %v732 = vpop.f32.mrf.mxu0
  %v733 = vadd.f32 0.0, %v732
  %v734 = vpop.f32.mrf.mxu0
  %735 = vmatprep.mubr.f32.mxu0 %v615
  %736 = vmatmul.mubr.f32.gmra.mxu0 %v614
  %v737 = vpop.f32.mrf.mxu0
  %v738 = vadd.f32 0.0, %v737
  %v739 = vpop.f32.mrf.mxu0
  %740 = vmatprep.mubr.f32.mxu0 %v617
  %741 = vmatmul.mubr.f32.gmra.mxu0 %v616
  %v742 = vpop.f32.mrf.mxu0
  %v743 = vadd.f32 0.0, %v742
  %v744 = vpop.f32.mrf.mxu0
  %745 = vmatprep.mubr.f32.mxu0 %v619
  %746 = vmatmul.mubr.f32.gmra.mxu0 %v618
  %v747 = vpop.f32.mrf.mxu0
  %v748 = vadd.f32 0.0, %v747
  %v749 = vpop.f32.mrf.mxu0
  %750 = vmatprep.mubr.f32.mxu0 %v621
  %751 = vmatmul.mubr.f32.gmra.mxu0 %v620
  %v752 = vpop.f32.mrf.mxu0
  %v753 = vadd.f32 0.0, %v752
  %v754 = vpop.f32.mrf.mxu0
  %755 = vmatprep.mubr.f32.mxu0 %v623
  %756 = vmatmul.mubr.f32.gmra.mxu0 %v622
  %v757 = vpop.f32.mrf.mxu0
  %v758 = vadd.f32 0.0, %v757
  %v759 = vpop.f32.mrf.mxu0
  %760 = vdwg.mxu0
  %v761 = vadd.f32 %v574, %v723
  %v762 = vadd.f32 %v575, %v728
  %v763 = vadd.f32 %v576, %v733
  %v764 = vadd.f32 %v577, %v738
  %v765 = vadd.f32 %v578, %v743
  %v766 = vadd.f32 %v579, %v748
  %v767 = vadd.f32 %v580, %v753
  %v768 = vadd.f32 %v581, %v758
  %vm769 = vcmask 523264
  %v771 = vsel %vm769, %v23, 0
  %v774 = vsel %vm769, %v24, 0
  %v777 = vsel %vm769, %v25, 0
  %779 = vmatprep.subr.mxu0 0.0
  %780 = vmatpush1.msra.mxu0 0.0
  %781 = vmatprep.subr.mxu0 0.0
  %782 = vmatpush1.msra.mxu0 0.0
  %783 = vmatprep.subr.mxu0 0.0
  %784 = vmatpush1.msra.mxu0 0.0
  %785 = vmatprep.subr.mxu0 0.0
  %786 = vmatpush1.msra.mxu0 0.0
  %787 = vmatprep.subr.mxu0 0.0
  %788 = vmatpush1.msra.mxu0 0.0
  %789 = vmatprep.subr.mxu0 0.0
  %790 = vmatpush1.msra.mxu0 0.0
  %791 = vmatprep.subr.mxu0 0.0
  %792 = vmatpush1.msra.mxu0 0.0
  %793 = vmatprep.subr.mxu0 0.0
  %794 = vmatpush1.msra.mxu0 0.0
  %795 = vmatprep.subr.mxu0 0.0
  %796 = vmatpush1.msra.mxu0 %v768
  %797 = vmatprep.subr.mxu0 0.0
  %798 = vmatpush1.msra.mxu0 %v767
  %799 = vmatprep.subr.mxu0 0.0
  %800 = vmatpush1.msra.mxu0 %v766
  %801 = vmatprep.subr.mxu0 0.0
  %802 = vmatpush1.msra.mxu0 %v765
  %803 = vmatprep.subr.mxu0 0.0
  %804 = vmatpush1.msra.mxu0 %v764
  %805 = vmatprep.subr.mxu0 0.0
  %806 = vmatpush1.msra.mxu0 %v763
  %807 = vmatprep.subr.mxu0 0.0
  %808 = vmatpush1.msra.mxu0 %v762
  %809 = vmatprep.subr.mxu0 0.0
  %810 = vmatpush1.msra.mxu0 %v761
  %811 = vmatprep.subr.mxu0 0.0
  %812 = vmatpush2.msra.mxu0 0.0
  %813 = vmatprep.subr.mxu0 0.0
  %814 = vmatpush2.msra.mxu0 0.0
  %815 = vmatprep.subr.mxu0 0.0
  %816 = vmatpush2.msra.mxu0 0.0
  %817 = vmatprep.subr.mxu0 0.0
  %818 = vmatpush2.msra.mxu0 0.0
  %819 = vmatprep.subr.mxu0 0.0
  %820 = vmatpush2.msra.mxu0 0.0
  %821 = vmatprep.subr.mxu0 0.0
  %822 = vmatpush2.msra.mxu0 0.0
  %823 = vmatprep.subr.mxu0 0.0
  %824 = vmatpush2.msra.mxu0 0.0
  %825 = vmatprep.subr.mxu0 0.0
  %826 = vmatpush2.msra.mxu0 0.0
  %827 = vmatprep.subr.mxu0 0.0
  %828 = vmatpush2.msra.mxu0 0.0
  %829 = vmatprep.subr.mxu0 0.0
  %830 = vmatpush2.msra.mxu0 0.0
  %831 = vmatprep.subr.mxu0 0.0
  %832 = vmatpush2.msra.mxu0 0.0
  %833 = vmatprep.subr.mxu0 0.0
  %834 = vmatpush2.msra.mxu0 0.0
  %835 = vmatprep.subr.mxu0 0.0
  %836 = vmatpush2.msra.mxu0 0.0
  %837 = vmatprep.subr.mxu0 0.0
  %838 = vmatpush2.msra.mxu0 0.0
  %839 = vmatprep.subr.mxu0 0.0
  %840 = vmatpush2.msra.mxu0 0.0
  %841 = vmatprep.subr.mxu0 0.0
  %842 = vmatpush2.msra.mxu0 0.0
  %843 = vmatprep.mubr.f32.mxu0 0.0
  %844 = vmatmul.mubr.f32.gmra.mxu0 %v771
  %v845 = vpop.f32.mrf.mxu0
  %v846 = vadd.f32 0.0, %v845
  %v847 = vpop.f32.mrf.mxu0
  %848 = vmatprep.mubr.f32.mxu0 0.0
  %849 = vmatmul.mubr.f32.gmra.mxu0 %v774
  %v850 = vpop.f32.mrf.mxu0
  %v851 = vadd.f32 0.0, %v850
  %v852 = vpop.f32.mrf.mxu0
  %853 = vmatprep.mubr.f32.mxu0 0.0
  %854 = vmatmul.mubr.f32.gmra.mxu0 %v777
  %v855 = vpop.f32.mrf.mxu0
  %v856 = vadd.f32 0.0, %v855
  %v857 = vpop.f32.mrf.mxu0
  %858 = vdwg.mxu0
  %vm862 = vcmask 1046528
  %v863 = vrot.slane %v846, 1
  %v864 = vrot.slane %v851, 1
  %v865 = vsel %vm862, %v863, %v864
  %v866 = vrot.slane %v856, 1
  %v867 = vsel %vm862, %v864, %v866
  %868 = vrot.lane.b32.xlu0 %v865, 120
  %v869 = vpop.permute.xlu0 %868
  %870 = vrot.lane.b32.xlu0 %v867, 120
  %v871 = vpop.permute.xlu0 %870
  %v874 = vadd.f32 %v846, %v869
  %v875 = vadd.f32 %v851, %v871
  %vm876 = vcmask 1045504
  %v877 = vrot.slane %v846, 2
  %v878 = vrot.slane %v851, 2
  %v879 = vsel %vm876, %v877, %v878
  %v880 = vrot.slane %v856, 2
  %v881 = vsel %vm876, %v878, %v880
  %882 = vrot.lane.b32.xlu0 %v879, 112
  %v883 = vpop.permute.xlu0 %882
  %884 = vrot.lane.b32.xlu0 %v881, 112
  %v885 = vpop.permute.xlu0 %884
  %v888 = vadd.f32 %v874, %v883
  %v889 = vadd.f32 %v875, %v885
  %v891 = vlaneseq
  %v892 = vshrl.u32 %v891, 7
  %v893 = vsub.s32 0, %v892
  %v894 = vrot.slane %v26, %v893
  %v896 = vadd.f32 %v888, %v894
  %v897 = vadd.f32 %v889, %v894
  %v898 = vmax.f32 %v896, 0.0
  %v899 = vmax.f32 %v897, 0.0
  %v902 = vrot.slane %v898, 1
  %v903 = vrot.slane %v899, 1
  %v904 = vsel %vm862, %v902, %v903
  %v907 = vmax.f32 %v898, %v904
  %v908 = vmax.f32 %v899, %v903
  %v909 = vrot.slane %v898, 2
  %v910 = vrot.slane %v899, 2
  %v911 = vsel %vm876, %v909, %v910
  %v914 = vmax.f32 %v907, %v911
  %v915 = vmax.f32 %v908, %v910
  %917 = vset.pattern.permute.xlu0 0
  %918 = vperm.xlu0 %917, %v28
  %v919 = vpop.permute.xlu0 %918
  %vm921 = vcmask 113664
  %v923 = vsel %vm921, %v27, 0
  %v926 = vsel %vm876, %v915, 0
  %928 = vmatprep.subr.mxu0 0.0
  %929 = vmatpush1.msra.mxu0 0.0
  %930 = vmatprep.subr.mxu0 0.0
  %931 = vmatpush1.msra.mxu0 0.0
  %932 = vmatprep.subr.mxu0 0.0
  %933 = vmatpush1.msra.mxu0 0.0
  %934 = vmatprep.subr.mxu0 0.0
  %935 = vmatpush1.msra.mxu0 0.0
  %936 = vmatprep.subr.mxu0 0.0
  %937 = vmatpush1.msra.mxu0 0.0
  %938 = vmatprep.subr.mxu0 0.0
  %939 = vmatpush1.msra.mxu0 0.0
  %940 = vmatprep.subr.mxu0 0.0
  %941 = vmatpush1.msra.mxu0 0.0
  %942 = vmatprep.subr.mxu0 0.0
  %943 = vmatpush1.msra.mxu0 0.0
  %944 = vmatprep.subr.mxu0 0.0
  %945 = vmatpush1.msra.mxu0 0.0
  %946 = vmatprep.subr.mxu0 0.0
  %947 = vmatpush1.msra.mxu0 0.0
  %948 = vmatprep.subr.mxu0 0.0
  %949 = vmatpush1.msra.mxu0 0.0
  %950 = vmatprep.subr.mxu0 0.0
  %951 = vmatpush1.msra.mxu0 0.0
  %952 = vmatprep.subr.mxu0 0.0
  %953 = vmatpush1.msra.mxu0 0.0
  %954 = vmatprep.subr.mxu0 0.0
  %955 = vmatpush1.msra.mxu0 0.0
  %956 = vmatprep.subr.mxu0 0.0
  %957 = vmatpush1.msra.mxu0 %v926
  %958 = vmatprep.subr.mxu0 0.0
  %959 = vmatpush1.msra.mxu0 %v914
  %960 = vmatprep.subr.mxu0 0.0
  %961 = vmatpush2.msra.mxu0 0.0
  %962 = vmatprep.subr.mxu0 0.0
  %963 = vmatpush2.msra.mxu0 0.0
  %964 = vmatprep.subr.mxu0 0.0
  %965 = vmatpush2.msra.mxu0 0.0
  %966 = vmatprep.subr.mxu0 0.0
  %967 = vmatpush2.msra.mxu0 0.0
  %968 = vmatprep.subr.mxu0 0.0
  %969 = vmatpush2.msra.mxu0 0.0
  %970 = vmatprep.subr.mxu0 0.0
  %971 = vmatpush2.msra.mxu0 0.0
  %972 = vmatprep.subr.mxu0 0.0
  %973 = vmatpush2.msra.mxu0 0.0
  %974 = vmatprep.subr.mxu0 0.0
  %975 = vmatpush2.msra.mxu0 0.0
  %976 = vmatprep.subr.mxu0 0.0
  %977 = vmatpush2.msra.mxu0 0.0
  %978 = vmatprep.subr.mxu0 0.0
  %979 = vmatpush2.msra.mxu0 0.0
  %980 = vmatprep.subr.mxu0 0.0
  %981 = vmatpush2.msra.mxu0 0.0
  %982 = vmatprep.subr.mxu0 0.0
  %983 = vmatpush2.msra.mxu0 0.0
  %984 = vmatprep.subr.mxu0 0.0
  %985 = vmatpush2.msra.mxu0 0.0
  %986 = vmatprep.subr.mxu0 0.0
  %987 = vmatpush2.msra.mxu0 0.0
  %988 = vmatprep.subr.mxu0 0.0
  %989 = vmatpush2.msra.mxu0 0.0
  %990 = vmatprep.subr.mxu0 0.0
  %991 = vmatpush2.msra.mxu0 0.0
  %992 = vmatprep.mubr.f32.mxu0 0.0
  %993 = vmatmul.mubr.f32.gmra.mxu0 %v923
  %v994 = vpop.f32.mrf.mxu0
  %v995 = vadd.f32 %v919, %v994
  %v996 = vpop.f32.mrf.mxu0
  %997 = vdwg.mxu0
  %v998 = vsub.f32 0.0, %v995
  %v999 = vmul.f32 %v998, 1.442695
  %v1000 = vpow.pop %v999
  %v1001 = vadd.f32 %v1000, 1.0
  %v1002 = vrcp.pop %v1001
  %vm1003 = vcmask 59392
  %1004 = vst.msk [vmem:[%s6] sm:$0x7] %vm1003, %v1002
  %s1005 = scalar_lea.vmem %s0, 1
  %v1006 = vld [vmem:[%s1005] ss:$2 sm:$0x3]
  %v1007 = vlaneseq
  %v1008 = vshrl.u32 %v1007, 7
  %v1009 = vsub.s32 0, %v1008
  %v1010 = vrot.slane %v1006, %v1009
  %v1011 = vlaneseq
  %v1012 = vshrl.u32 %v1011, 7
  %v1013 = vsub.s32 1, %v1012
  %v1014 = vrot.slane %v1006, %v1013
  %vm1015 = vcmp.eq.s32.totalorder %v30, %v1010
  %vm1016 = vcmp.eq.s32.totalorder %v30, %v1014
  %vm1017 = vcmp.eq.s32.totalorder %v31, %v1010
  %vm1018 = vcmp.eq.s32.totalorder %v31, %v1014
  %vm1019 = vcmp.eq.s32.totalorder %v32, %v1010
  %vm1020 = vcmp.eq.s32.totalorder %v32, %v1014
  %vm1021 = vcmp.eq.s32.totalorder %v33, %v1010
  %vm1022 = vcmp.eq.s32.totalorder %v33, %v1014
  %vm1023 = vcmp.eq.s32.totalorder %v34, %v1010
  %vm1024 = vcmp.eq.s32.totalorder %v34, %v1014
  %vm1025 = vcmp.eq.s32.totalorder %v35, %v1010
  %vm1026 = vcmp.eq.s32.totalorder %v35, %v1014
  %vm1027 = vcmp.eq.s32.totalorder %v36, %v1010
  %vm1028 = vcmp.eq.s32.totalorder %v36, %v1014
  %vm1029 = vcmp.eq.s32.totalorder %v37, %v1010
  %vm1030 = vcmp.eq.s32.totalorder %v37, %v1014
  %v1031 = vsel %vm1015, 1.0, 0.0
  %v1032 = vsel %vm1016, 1.0, 0.0
  %v1033 = vsel %vm1017, 1.0, 0.0
  %v1034 = vsel %vm1018, 1.0, 0.0
  %v1035 = vsel %vm1019, 1.0, 0.0
  %v1036 = vsel %vm1020, 1.0, 0.0
  %v1037 = vsel %vm1021, 1.0, 0.0
  %v1038 = vsel %vm1022, 1.0, 0.0
  %v1039 = vsel %vm1023, 1.0, 0.0
  %v1040 = vsel %vm1024, 1.0, 0.0
  %v1041 = vsel %vm1025, 1.0, 0.0
  %v1042 = vsel %vm1026, 1.0, 0.0
  %v1043 = vsel %vm1027, 1.0, 0.0
  %v1044 = vsel %vm1028, 1.0, 0.0
  %v1045 = vsel %vm1029, 1.0, 0.0
  %v1046 = vsel %vm1030, 1.0, 0.0
  %v1047 = vld [vmem:[%s1] sm:$0xff]
  %v1048 = vld [vmem:[%s1 + $0x8] sm:$0xff]
  %v1049 = vld [vmem:[%s1 + $0x10] sm:$0xff]
  %v1050 = vld [vmem:[%s1 + $0x18] sm:$0xff]
  %v1051 = vld [vmem:[%s1 + $0x20] sm:$0xff]
  %v1052 = vld [vmem:[%s1 + $0x28] sm:$0xff]
  %v1053 = vld [vmem:[%s1 + $0x30] sm:$0xff]
  %v1054 = vld [vmem:[%s1 + $0x38] sm:$0xff]
  %v1055 = vld [vmem:[%s1 + $0x40] sm:$0xff]
  %v1056 = vld [vmem:[%s1 + $0x48] sm:$0xff]
  %v1057 = vld [vmem:[%s1 + $0x50] sm:$0xff]
  %v1058 = vld [vmem:[%s1 + $0x58] sm:$0xff]
  %v1059 = vld [vmem:[%s1 + $0x60] sm:$0xff]
  %v1060 = vld [vmem:[%s1 + $0x68] sm:$0xff]
  %v1061 = vld [vmem:[%s1 + $0x70] sm:$0xff]
  %v1062 = vld [vmem:[%s1 + $0x78] sm:$0xff]
  %v1063 = vld [vmem:[%s1 + $0x80] sm:$0xff]
  %v1064 = vld [vmem:[%s1 + $0x88] sm:$0xff]
  %v1065 = vld [vmem:[%s1 + $0x90] sm:$0xff]
  %v1066 = vld [vmem:[%s1 + $0x98] sm:$0xff]
  %v1067 = vld [vmem:[%s1 + $0xa0] sm:$0xff]
  %v1068 = vld [vmem:[%s1 + $0xa8] sm:$0xff]
  %v1069 = vld [vmem:[%s1 + $0xb0] sm:$0xff]
  %v1070 = vld [vmem:[%s1 + $0xb8] sm:$0xff]
  %v1071 = vld [vmem:[%s1 + $0xc0] sm:$0xff]
  %v1072 = vld [vmem:[%s1 + $0xc8] sm:$0xff]
  %v1073 = vld [vmem:[%s1 + $0xd0] sm:$0xff]
  %v1074 = vld [vmem:[%s1 + $0xd8] sm:$0xff]
  %v1075 = vld [vmem:[%s1 + $0xe0] sm:$0xff]
  %v1076 = vld [vmem:[%s1 + $0xe8] sm:$0xff]
  %v1077 = vld [vmem:[%s1 + $0xf0] sm:$0xff]
  %v1078 = vld [vmem:[%s1 + $0xf8] sm:$0xff]
  %s1079 = scalar_lea.vmem %s0, 5
  %v1080 = vld [vmem:[%s1079] ss:$2 sm:$0x3]
  %v1081 = vlaneseq
  %v1082 = vshrl.u32 %v1081, 7
  %v1083 = vsub.s32 0, %v1082
  %v1084 = vrot.slane %v1080, %v1083
  %v1085 = vlaneseq
  %v1086 = vshrl.u32 %v1085, 7
  %v1087 = vsub.s32 1, %v1086
  %v1088 = vrot.slane %v1080, %v1087
  %vm1089 = vcmp.eq.s32.totalorder %v30, %v1084
  %vm1090 = vcmp.eq.s32.totalorder %v30, %v1088
  %vm1091 = vcmp.eq.s32.totalorder %v31, %v1084
  %vm1092 = vcmp.eq.s32.totalorder %v31, %v1088
  %vm1093 = vcmp.eq.s32.totalorder %v32, %v1084
  %vm1094 = vcmp.eq.s32.totalorder %v32, %v1088
  %vm1095 = vcmp.eq.s32.totalorder %v33, %v1084
  %vm1096 = vcmp.eq.s32.totalorder %v33, %v1088
  %vm1097 = vcmp.eq.s32.totalorder %v34, %v1084
  %vm1098 = vcmp.eq.s32.totalorder %v34, %v1088
  %vm1099 = vcmp.eq.s32.totalorder %v35, %v1084
  %vm1100 = vcmp.eq.s32.totalorder %v35, %v1088
  %vm1101 = vcmp.eq.s32.totalorder %v36, %v1084
  %vm1102 = vcmp.eq.s32.totalorder %v36, %v1088
  %vm1103 = vcmp.eq.s32.totalorder %v37, %v1084
  %vm1104 = vcmp.eq.s32.totalorder %v37, %v1088
  %v1105 = vsel %vm1089, 1.0, 0.0
  %v1106 = vsel %vm1090, 1.0, 0.0
  %v1107 = vsel %vm1091, 1.0, 0.0
  %v1108 = vsel %vm1092, 1.0, 0.0
  %v1109 = vsel %vm1093, 1.0, 0.0
  %v1110 = vsel %vm1094, 1.0, 0.0
  %v1111 = vsel %vm1095, 1.0, 0.0
  %v1112 = vsel %vm1096, 1.0, 0.0
  %v1113 = vsel %vm1097, 1.0, 0.0
  %v1114 = vsel %vm1098, 1.0, 0.0
  %v1115 = vsel %vm1099, 1.0, 0.0
  %v1116 = vsel %vm1100, 1.0, 0.0
  %v1117 = vsel %vm1101, 1.0, 0.0
  %v1118 = vsel %vm1102, 1.0, 0.0
  %v1119 = vsel %vm1103, 1.0, 0.0
  %v1120 = vsel %vm1104, 1.0, 0.0
  %v1121 = vld [vmem:[%s1 + $0x100] sm:$0xff]
  %v1122 = vld [vmem:[%s1 + $0x108] sm:$0xff]
  %v1123 = vld [vmem:[%s1 + $0x110] sm:$0xff]
  %v1124 = vld [vmem:[%s1 + $0x118] sm:$0xff]
  %v1125 = vld [vmem:[%s1 + $0x120] sm:$0xff]
  %v1126 = vld [vmem:[%s1 + $0x128] sm:$0xff]
  %v1127 = vld [vmem:[%s1 + $0x130] sm:$0xff]
  %v1128 = vld [vmem:[%s1 + $0x138] sm:$0xff]
  %v1129 = vld [vmem:[%s1 + $0x140] sm:$0xff]
  %v1130 = vld [vmem:[%s1 + $0x148] sm:$0xff]
  %v1131 = vld [vmem:[%s1 + $0x150] sm:$0xff]
  %v1132 = vld [vmem:[%s1 + $0x158] sm:$0xff]
  %v1133 = vld [vmem:[%s1 + $0x160] sm:$0xff]
  %v1134 = vld [vmem:[%s1 + $0x168] sm:$0xff]
  %v1135 = vld [vmem:[%s1 + $0x170] sm:$0xff]
  %v1136 = vld [vmem:[%s1 + $0x178] sm:$0xff]
  %v1137 = vld [vmem:[%s1 + $0x180] sm:$0xff]
  %v1138 = vld [vmem:[%s1 + $0x188] sm:$0xff]
  %v1139 = vld [vmem:[%s1 + $0x190] sm:$0xff]
  %v1140 = vld [vmem:[%s1 + $0x198] sm:$0xff]
  %v1141 = vld [vmem:[%s1 + $0x1a0] sm:$0xff]
  %v1142 = vld [vmem:[%s1 + $0x1a8] sm:$0xff]
  %v1143 = vld [vmem:[%s1 + $0x1b0] sm:$0xff]
  %v1144 = vld [vmem:[%s1 + $0x1b8] sm:$0xff]
  %v1145 = vld [vmem:[%s1 + $0x1c0] sm:$0xff]
  %v1146 = vld [vmem:[%s1 + $0x1c8] sm:$0xff]
  %v1147 = vld [vmem:[%s1 + $0x1d0] sm:$0xff]
  %v1148 = vld [vmem:[%s1 + $0x1d8] sm:$0xff]
  %v1149 = vld [vmem:[%s1 + $0x1e0] sm:$0xff]
  %v1150 = vld [vmem:[%s1 + $0x1e8] sm:$0xff]
  %v1151 = vld [vmem:[%s1 + $0x1f0] sm:$0xff]
  %v1152 = vld [vmem:[%s1 + $0x1f8] sm:$0xff]
  %1153 = vmatprep.subr.mxu0 0.0
  %1154 = vmatpush1.msra.mxu0 %v1136
  %1155 = vmatprep.subr.mxu0 0.0
  %1156 = vmatpush1.msra.mxu0 %v1135
  %1157 = vmatprep.subr.mxu0 0.0
  %1158 = vmatpush1.msra.mxu0 %v1134
  %1159 = vmatprep.subr.mxu0 0.0
  %1160 = vmatpush1.msra.mxu0 %v1133
  %1161 = vmatprep.subr.mxu0 0.0
  %1162 = vmatpush1.msra.mxu0 %v1132
  %1163 = vmatprep.subr.mxu0 0.0
  %1164 = vmatpush1.msra.mxu0 %v1131
  %1165 = vmatprep.subr.mxu0 0.0
  %1166 = vmatpush1.msra.mxu0 %v1130
  %1167 = vmatprep.subr.mxu0 0.0
  %1168 = vmatpush1.msra.mxu0 %v1129
  %1169 = vmatprep.subr.mxu0 0.0
  %1170 = vmatpush1.msra.mxu0 %v1128
  %1171 = vmatprep.subr.mxu0 0.0
  %1172 = vmatpush1.msra.mxu0 %v1127
  %1173 = vmatprep.subr.mxu0 0.0
  %1174 = vmatpush1.msra.mxu0 %v1126
  %1175 = vmatprep.subr.mxu0 0.0
  %1176 = vmatpush1.msra.mxu0 %v1125
  %1177 = vmatprep.subr.mxu0 0.0
  %1178 = vmatpush1.msra.mxu0 %v1124
  %1179 = vmatprep.subr.mxu0 0.0
  %1180 = vmatpush1.msra.mxu0 %v1123
  %1181 = vmatprep.subr.mxu0 0.0
  %1182 = vmatpush1.msra.mxu0 %v1122
  %1183 = vmatprep.subr.mxu0 0.0
  %1184 = vmatpush1.msra.mxu0 %v1121
  %1185 = vmatprep.subr.mxu0 0.0
  %1186 = vmatpush2.msra.mxu0 %v1152
  %1187 = vmatprep.subr.mxu0 0.0
  %1188 = vmatpush2.msra.mxu0 %v1151
  %1189 = vmatprep.subr.mxu0 0.0
  %1190 = vmatpush2.msra.mxu0 %v1150
  %1191 = vmatprep.subr.mxu0 0.0
  %1192 = vmatpush2.msra.mxu0 %v1149
  %1193 = vmatprep.subr.mxu0 0.0
  %1194 = vmatpush2.msra.mxu0 %v1148
  %1195 = vmatprep.subr.mxu0 0.0
  %1196 = vmatpush2.msra.mxu0 %v1147
  %1197 = vmatprep.subr.mxu0 0.0
  %1198 = vmatpush2.msra.mxu0 %v1146
  %1199 = vmatprep.subr.mxu0 0.0
  %1200 = vmatpush2.msra.mxu0 %v1145
  %1201 = vmatprep.subr.mxu0 0.0
  %1202 = vmatpush2.msra.mxu0 %v1144
  %1203 = vmatprep.subr.mxu0 0.0
  %1204 = vmatpush2.msra.mxu0 %v1143
  %1205 = vmatprep.subr.mxu0 0.0
  %1206 = vmatpush2.msra.mxu0 %v1142
  %1207 = vmatprep.subr.mxu0 0.0
  %1208 = vmatpush2.msra.mxu0 %v1141
  %1209 = vmatprep.subr.mxu0 0.0
  %1210 = vmatpush2.msra.mxu0 %v1140
  %1211 = vmatprep.subr.mxu0 0.0
  %1212 = vmatpush2.msra.mxu0 %v1139
  %1213 = vmatprep.subr.mxu0 0.0
  %1214 = vmatpush2.msra.mxu0 %v1138
  %1215 = vmatprep.subr.mxu0 0.0
  %1216 = vmatpush2.msra.mxu0 %v1137
  %1217 = vmatprep.mubr.f32.mxu0 %v1106
  %1218 = vmatmul.mubr.f32.gmra.mxu0 %v1105
  %v1219 = vpop.f32.mrf.mxu0
  %v1220 = vadd.f32 0.0, %v1219
  %v1221 = vpop.f32.mrf.mxu0
  %1222 = vmatprep.mubr.f32.mxu0 %v1108
  %1223 = vmatmul.mubr.f32.gmra.mxu0 %v1107
  %v1224 = vpop.f32.mrf.mxu0
  %v1225 = vadd.f32 0.0, %v1224
  %v1226 = vpop.f32.mrf.mxu0
  %1227 = vmatprep.mubr.f32.mxu0 %v1110
  %1228 = vmatmul.mubr.f32.gmra.mxu0 %v1109
  %v1229 = vpop.f32.mrf.mxu0
  %v1230 = vadd.f32 0.0, %v1229
  %v1231 = vpop.f32.mrf.mxu0
  %1232 = vmatprep.mubr.f32.mxu0 %v1112
  %1233 = vmatmul.mubr.f32.gmra.mxu0 %v1111
  %v1234 = vpop.f32.mrf.mxu0
  %v1235 = vadd.f32 0.0, %v1234
  %v1236 = vpop.f32.mrf.mxu0
  %1237 = vmatprep.mubr.f32.mxu0 %v1114
  %1238 = vmatmul.mubr.f32.gmra.mxu0 %v1113
  %v1239 = vpop.f32.mrf.mxu0
  %v1240 = vadd.f32 0.0, %v1239
  %v1241 = vpop.f32.mrf.mxu0
  %1242 = vmatprep.mubr.f32.mxu0 %v1116
  %1243 = vmatmul.mubr.f32.gmra.mxu0 %v1115
  %v1244 = vpop.f32.mrf.mxu0
  %v1245 = vadd.f32 0.0, %v1244
  %v1246 = vpop.f32.mrf.mxu0
  %1247 = vmatprep.mubr.f32.mxu0 %v1118
  %1248 = vmatmul.mubr.f32.gmra.mxu0 %v1117
  %v1249 = vpop.f32.mrf.mxu0
  %v1250 = vadd.f32 0.0, %v1249
  %v1251 = vpop.f32.mrf.mxu0
  %1252 = vmatprep.mubr.f32.mxu0 %v1120
  %1253 = vmatmul.mubr.f32.gmra.mxu0 %v1119
  %v1254 = vpop.f32.mrf.mxu0
  %v1255 = vadd.f32 0.0, %v1254
  %v1256 = vpop.f32.mrf.mxu0
  %1257 = vdwg.mxu0
  %1258 = vmatprep.subr.mxu0 0.0
  %1259 = vmatpush1.msra.mxu0 %v1062
  %1260 = vmatprep.subr.mxu0 0.0
  %1261 = vmatpush1.msra.mxu0 %v1061
  %1262 = vmatprep.subr.mxu0 0.0
  %1263 = vmatpush1.msra.mxu0 %v1060
  %1264 = vmatprep.subr.mxu0 0.0
  %1265 = vmatpush1.msra.mxu0 %v1059
  %1266 = vmatprep.subr.mxu0 0.0
  %1267 = vmatpush1.msra.mxu0 %v1058
  %1268 = vmatprep.subr.mxu0 0.0
  %1269 = vmatpush1.msra.mxu0 %v1057
  %1270 = vmatprep.subr.mxu0 0.0
  %1271 = vmatpush1.msra.mxu0 %v1056
  %1272 = vmatprep.subr.mxu0 0.0
  %1273 = vmatpush1.msra.mxu0 %v1055
  %1274 = vmatprep.subr.mxu0 0.0
  %1275 = vmatpush1.msra.mxu0 %v1054
  %1276 = vmatprep.subr.mxu0 0.0
  %1277 = vmatpush1.msra.mxu0 %v1053
  %1278 = vmatprep.subr.mxu0 0.0
  %1279 = vmatpush1.msra.mxu0 %v1052
  %1280 = vmatprep.subr.mxu0 0.0
  %1281 = vmatpush1.msra.mxu0 %v1051
  %1282 = vmatprep.subr.mxu0 0.0
  %1283 = vmatpush1.msra.mxu0 %v1050
  %1284 = vmatprep.subr.mxu0 0.0
  %1285 = vmatpush1.msra.mxu0 %v1049
  %1286 = vmatprep.subr.mxu0 0.0
  %1287 = vmatpush1.msra.mxu0 %v1048
  %1288 = vmatprep.subr.mxu0 0.0
  %1289 = vmatpush1.msra.mxu0 %v1047
  %1290 = vmatprep.subr.mxu0 0.0
  %1291 = vmatpush2.msra.mxu0 %v1078
  %1292 = vmatprep.subr.mxu0 0.0
  %1293 = vmatpush2.msra.mxu0 %v1077
  %1294 = vmatprep.subr.mxu0 0.0
  %1295 = vmatpush2.msra.mxu0 %v1076
  %1296 = vmatprep.subr.mxu0 0.0
  %1297 = vmatpush2.msra.mxu0 %v1075
  %1298 = vmatprep.subr.mxu0 0.0
  %1299 = vmatpush2.msra.mxu0 %v1074
  %1300 = vmatprep.subr.mxu0 0.0
  %1301 = vmatpush2.msra.mxu0 %v1073
  %1302 = vmatprep.subr.mxu0 0.0
  %1303 = vmatpush2.msra.mxu0 %v1072
  %1304 = vmatprep.subr.mxu0 0.0
  %1305 = vmatpush2.msra.mxu0 %v1071
  %1306 = vmatprep.subr.mxu0 0.0
  %1307 = vmatpush2.msra.mxu0 %v1070
  %1308 = vmatprep.subr.mxu0 0.0
  %1309 = vmatpush2.msra.mxu0 %v1069
  %1310 = vmatprep.subr.mxu0 0.0
  %1311 = vmatpush2.msra.mxu0 %v1068
  %1312 = vmatprep.subr.mxu0 0.0
  %1313 = vmatpush2.msra.mxu0 %v1067
  %1314 = vmatprep.subr.mxu0 0.0
  %1315 = vmatpush2.msra.mxu0 %v1066
  %1316 = vmatprep.subr.mxu0 0.0
  %1317 = vmatpush2.msra.mxu0 %v1065
  %1318 = vmatprep.subr.mxu0 0.0
  %1319 = vmatpush2.msra.mxu0 %v1064
  %1320 = vmatprep.subr.mxu0 0.0
  %1321 = vmatpush2.msra.mxu0 %v1063
  %1322 = vmatprep.mubr.f32.mxu0 %v1032
  %1323 = vmatmul.mubr.f32.gmra.mxu0 %v1031
  %v1324 = vpop.f32.mrf.mxu0
  %v1325 = vadd.f32 %v1220, %v1324
  %v1326 = vpop.f32.mrf.mxu0
  %1327 = vmatprep.mubr.f32.mxu0 %v1034
  %1328 = vmatmul.mubr.f32.gmra.mxu0 %v1033
  %v1329 = vpop.f32.mrf.mxu0
  %v1330 = vadd.f32 %v1225, %v1329
  %v1331 = vpop.f32.mrf.mxu0
  %1332 = vmatprep.mubr.f32.mxu0 %v1036
  %1333 = vmatmul.mubr.f32.gmra.mxu0 %v1035
  %v1334 = vpop.f32.mrf.mxu0
  %v1335 = vadd.f32 %v1230, %v1334
  %v1336 = vpop.f32.mrf.mxu0
  %1337 = vmatprep.mubr.f32.mxu0 %v1038
  %1338 = vmatmul.mubr.f32.gmra.mxu0 %v1037
  %v1339 = vpop.f32.mrf.mxu0
  %v1340 = vadd.f32 %v1235, %v1339
  %v1341 = vpop.f32.mrf.mxu0
  %1342 = vmatprep.mubr.f32.mxu0 %v1040
  %1343 = vmatmul.mubr.f32.gmra.mxu0 %v1039
  %v1344 = vpop.f32.mrf.mxu0
  %v1345 = vadd.f32 %v1240, %v1344
  %v1346 = vpop.f32.mrf.mxu0
  %1347 = vmatprep.mubr.f32.mxu0 %v1042
  %1348 = vmatmul.mubr.f32.gmra.mxu0 %v1041
  %v1349 = vpop.f32.mrf.mxu0
  %v1350 = vadd.f32 %v1245, %v1349
  %v1351 = vpop.f32.mrf.mxu0
  %1352 = vmatprep.mubr.f32.mxu0 %v1044
  %1353 = vmatmul.mubr.f32.gmra.mxu0 %v1043
  %v1354 = vpop.f32.mrf.mxu0
  %v1355 = vadd.f32 %v1250, %v1354
  %v1356 = vpop.f32.mrf.mxu0
  %1357 = vmatprep.mubr.f32.mxu0 %v1046
  %1358 = vmatmul.mubr.f32.gmra.mxu0 %v1045
  %v1359 = vpop.f32.mrf.mxu0
  %v1360 = vadd.f32 %v1255, %v1359
  %v1361 = vpop.f32.mrf.mxu0
  %1362 = vdwg.mxu0
  %s1363 = scalar_lea.vmem %s0, 9
  %v1364 = vld [vmem:[%s1363] ss:$2 sm:$0x3]
  %v1365 = vlaneseq
  %v1366 = vshrl.u32 %v1365, 7
  %v1367 = vsub.s32 0, %v1366
  %v1368 = vrot.slane %v1364, %v1367
  %v1369 = vlaneseq
  %v1370 = vshrl.u32 %v1369, 7
  %v1371 = vsub.s32 1, %v1370
  %v1372 = vrot.slane %v1364, %v1371
  %vm1373 = vcmp.eq.s32.totalorder %v30, %v1368
  %vm1374 = vcmp.eq.s32.totalorder %v30, %v1372
  %vm1375 = vcmp.eq.s32.totalorder %v31, %v1368
  %vm1376 = vcmp.eq.s32.totalorder %v31, %v1372
  %vm1377 = vcmp.eq.s32.totalorder %v32, %v1368
  %vm1378 = vcmp.eq.s32.totalorder %v32, %v1372
  %vm1379 = vcmp.eq.s32.totalorder %v33, %v1368
  %vm1380 = vcmp.eq.s32.totalorder %v33, %v1372
  %vm1381 = vcmp.eq.s32.totalorder %v34, %v1368
  %vm1382 = vcmp.eq.s32.totalorder %v34, %v1372
  %vm1383 = vcmp.eq.s32.totalorder %v35, %v1368
  %vm1384 = vcmp.eq.s32.totalorder %v35, %v1372
  %vm1385 = vcmp.eq.s32.totalorder %v36, %v1368
  %vm1386 = vcmp.eq.s32.totalorder %v36, %v1372
  %vm1387 = vcmp.eq.s32.totalorder %v37, %v1368
  %vm1388 = vcmp.eq.s32.totalorder %v37, %v1372
  %v1389 = vsel %vm1373, 1.0, 0.0
  %v1390 = vsel %vm1374, 1.0, 0.0
  %v1391 = vsel %vm1375, 1.0, 0.0
  %v1392 = vsel %vm1376, 1.0, 0.0
  %v1393 = vsel %vm1377, 1.0, 0.0
  %v1394 = vsel %vm1378, 1.0, 0.0
  %v1395 = vsel %vm1379, 1.0, 0.0
  %v1396 = vsel %vm1380, 1.0, 0.0
  %v1397 = vsel %vm1381, 1.0, 0.0
  %v1398 = vsel %vm1382, 1.0, 0.0
  %v1399 = vsel %vm1383, 1.0, 0.0
  %v1400 = vsel %vm1384, 1.0, 0.0
  %v1401 = vsel %vm1385, 1.0, 0.0
  %v1402 = vsel %vm1386, 1.0, 0.0
  %v1403 = vsel %vm1387, 1.0, 0.0
  %v1404 = vsel %vm1388, 1.0, 0.0
  %v1405 = vld [vmem:[%s1 + $0x200] sm:$0xff]
  %v1406 = vld [vmem:[%s1 + $0x208] sm:$0xff]
  %v1407 = vld [vmem:[%s1 + $0x210] sm:$0xff]
  %v1408 = vld [vmem:[%s1 + $0x218] sm:$0xff]
  %v1409 = vld [vmem:[%s1 + $0x220] sm:$0xff]
  %v1410 = vld [vmem:[%s1 + $0x228] sm:$0xff]
  %v1411 = vld [vmem:[%s1 + $0x230] sm:$0xff]
  %v1412 = vld [vmem:[%s1 + $0x238] sm:$0xff]
  %v1413 = vld [vmem:[%s1 + $0x240] sm:$0xff]
  %v1414 = vld [vmem:[%s1 + $0x248] sm:$0xff]
  %v1415 = vld [vmem:[%s1 + $0x250] sm:$0xff]
  %v1416 = vld [vmem:[%s1 + $0x258] sm:$0xff]
  %v1417 = vld [vmem:[%s1 + $0x260] sm:$0xff]
  %v1418 = vld [vmem:[%s1 + $0x268] sm:$0xff]
  %v1419 = vld [vmem:[%s1 + $0x270] sm:$0xff]
  %v1420 = vld [vmem:[%s1 + $0x278] sm:$0xff]
  %v1421 = vld [vmem:[%s1 + $0x280] sm:$0xff]
  %v1422 = vld [vmem:[%s1 + $0x288] sm:$0xff]
  %v1423 = vld [vmem:[%s1 + $0x290] sm:$0xff]
  %v1424 = vld [vmem:[%s1 + $0x298] sm:$0xff]
  %v1425 = vld [vmem:[%s1 + $0x2a0] sm:$0xff]
  %v1426 = vld [vmem:[%s1 + $0x2a8] sm:$0xff]
  %v1427 = vld [vmem:[%s1 + $0x2b0] sm:$0xff]
  %v1428 = vld [vmem:[%s1 + $0x2b8] sm:$0xff]
  %v1429 = vld [vmem:[%s1 + $0x2c0] sm:$0xff]
  %v1430 = vld [vmem:[%s1 + $0x2c8] sm:$0xff]
  %v1431 = vld [vmem:[%s1 + $0x2d0] sm:$0xff]
  %v1432 = vld [vmem:[%s1 + $0x2d8] sm:$0xff]
  %v1433 = vld [vmem:[%s1 + $0x2e0] sm:$0xff]
  %v1434 = vld [vmem:[%s1 + $0x2e8] sm:$0xff]
  %v1435 = vld [vmem:[%s1 + $0x2f0] sm:$0xff]
  %v1436 = vld [vmem:[%s1 + $0x2f8] sm:$0xff]
  %1437 = vmatprep.subr.mxu0 0.0
  %1438 = vmatpush1.msra.mxu0 %v1420
  %1439 = vmatprep.subr.mxu0 0.0
  %1440 = vmatpush1.msra.mxu0 %v1419
  %1441 = vmatprep.subr.mxu0 0.0
  %1442 = vmatpush1.msra.mxu0 %v1418
  %1443 = vmatprep.subr.mxu0 0.0
  %1444 = vmatpush1.msra.mxu0 %v1417
  %1445 = vmatprep.subr.mxu0 0.0
  %1446 = vmatpush1.msra.mxu0 %v1416
  %1447 = vmatprep.subr.mxu0 0.0
  %1448 = vmatpush1.msra.mxu0 %v1415
  %1449 = vmatprep.subr.mxu0 0.0
  %1450 = vmatpush1.msra.mxu0 %v1414
  %1451 = vmatprep.subr.mxu0 0.0
  %1452 = vmatpush1.msra.mxu0 %v1413
  %1453 = vmatprep.subr.mxu0 0.0
  %1454 = vmatpush1.msra.mxu0 %v1412
  %1455 = vmatprep.subr.mxu0 0.0
  %1456 = vmatpush1.msra.mxu0 %v1411
  %1457 = vmatprep.subr.mxu0 0.0
  %1458 = vmatpush1.msra.mxu0 %v1410
  %1459 = vmatprep.subr.mxu0 0.0
  %1460 = vmatpush1.msra.mxu0 %v1409
  %1461 = vmatprep.subr.mxu0 0.0
  %1462 = vmatpush1.msra.mxu0 %v1408
  %1463 = vmatprep.subr.mxu0 0.0
  %1464 = vmatpush1.msra.mxu0 %v1407
  %1465 = vmatprep.subr.mxu0 0.0
  %1466 = vmatpush1.msra.mxu0 %v1406
  %1467 = vmatprep.subr.mxu0 0.0
  %1468 = vmatpush1.msra.mxu0 %v1405
  %1469 = vmatprep.subr.mxu0 0.0
  %1470 = vmatpush2.msra.mxu0 %v1436
  %1471 = vmatprep.subr.mxu0 0.0
  %1472 = vmatpush2.msra.mxu0 %v1435
  %1473 = vmatprep.subr.mxu0 0.0
  %1474 = vmatpush2.msra.mxu0 %v1434
  %1475 = vmatprep.subr.mxu0 0.0
  %1476 = vmatpush2.msra.mxu0 %v1433
  %1477 = vmatprep.subr.mxu0 0.0
  %1478 = vmatpush2.msra.mxu0 %v1432
  %1479 = vmatprep.subr.mxu0 0.0
  %1480 = vmatpush2.msra.mxu0 %v1431
  %1481 = vmatprep.subr.mxu0 0.0
  %1482 = vmatpush2.msra.mxu0 %v1430
  %1483 = vmatprep.subr.mxu0 0.0
  %1484 = vmatpush2.msra.mxu0 %v1429
  %1485 = vmatprep.subr.mxu0 0.0
  %1486 = vmatpush2.msra.mxu0 %v1428
  %1487 = vmatprep.subr.mxu0 0.0
  %1488 = vmatpush2.msra.mxu0 %v1427
  %1489 = vmatprep.subr.mxu0 0.0
  %1490 = vmatpush2.msra.mxu0 %v1426
  %1491 = vmatprep.subr.mxu0 0.0
  %1492 = vmatpush2.msra.mxu0 %v1425
  %1493 = vmatprep.subr.mxu0 0.0
  %1494 = vmatpush2.msra.mxu0 %v1424
  %1495 = vmatprep.subr.mxu0 0.0
  %1496 = vmatpush2.msra.mxu0 %v1423
  %1497 = vmatprep.subr.mxu0 0.0
  %1498 = vmatpush2.msra.mxu0 %v1422
  %1499 = vmatprep.subr.mxu0 0.0
  %1500 = vmatpush2.msra.mxu0 %v1421
  %1501 = vmatprep.mubr.f32.mxu0 %v1390
  %1502 = vmatmul.mubr.f32.gmra.mxu0 %v1389
  %v1503 = vpop.f32.mrf.mxu0
  %v1504 = vadd.f32 0.0, %v1503
  %v1505 = vpop.f32.mrf.mxu0
  %1506 = vmatprep.mubr.f32.mxu0 %v1392
  %1507 = vmatmul.mubr.f32.gmra.mxu0 %v1391
  %v1508 = vpop.f32.mrf.mxu0
  %v1509 = vadd.f32 0.0, %v1508
  %v1510 = vpop.f32.mrf.mxu0
  %1511 = vmatprep.mubr.f32.mxu0 %v1394
  %1512 = vmatmul.mubr.f32.gmra.mxu0 %v1393
  %v1513 = vpop.f32.mrf.mxu0
  %v1514 = vadd.f32 0.0, %v1513
  %v1515 = vpop.f32.mrf.mxu0
  %1516 = vmatprep.mubr.f32.mxu0 %v1396
  %1517 = vmatmul.mubr.f32.gmra.mxu0 %v1395
  %v1518 = vpop.f32.mrf.mxu0
  %v1519 = vadd.f32 0.0, %v1518
  %v1520 = vpop.f32.mrf.mxu0
  %1521 = vmatprep.mubr.f32.mxu0 %v1398
  %1522 = vmatmul.mubr.f32.gmra.mxu0 %v1397
  %v1523 = vpop.f32.mrf.mxu0
  %v1524 = vadd.f32 0.0, %v1523
  %v1525 = vpop.f32.mrf.mxu0
  %1526 = vmatprep.mubr.f32.mxu0 %v1400
  %1527 = vmatmul.mubr.f32.gmra.mxu0 %v1399
  %v1528 = vpop.f32.mrf.mxu0
  %v1529 = vadd.f32 0.0, %v1528
  %v1530 = vpop.f32.mrf.mxu0
  %1531 = vmatprep.mubr.f32.mxu0 %v1402
  %1532 = vmatmul.mubr.f32.gmra.mxu0 %v1401
  %v1533 = vpop.f32.mrf.mxu0
  %v1534 = vadd.f32 0.0, %v1533
  %v1535 = vpop.f32.mrf.mxu0
  %1536 = vmatprep.mubr.f32.mxu0 %v1404
  %1537 = vmatmul.mubr.f32.gmra.mxu0 %v1403
  %v1538 = vpop.f32.mrf.mxu0
  %v1539 = vadd.f32 0.0, %v1538
  %v1540 = vpop.f32.mrf.mxu0
  %1541 = vdwg.mxu0
  %v1542 = vadd.f32 %v1325, %v1504
  %v1543 = vadd.f32 %v1330, %v1509
  %v1544 = vadd.f32 %v1335, %v1514
  %v1545 = vadd.f32 %v1340, %v1519
  %v1546 = vadd.f32 %v1345, %v1524
  %v1547 = vadd.f32 %v1350, %v1529
  %v1548 = vadd.f32 %v1355, %v1534
  %v1549 = vadd.f32 %v1360, %v1539
  %s1550 = scalar_lea.vmem %s0, 13
  %v1551 = vld [vmem:[%s1550] ss:$2 sm:$0x3]
  %v1552 = vlaneseq
  %v1553 = vshrl.u32 %v1552, 7
  %v1554 = vsub.s32 0, %v1553
  %v1555 = vrot.slane %v1551, %v1554
  %v1556 = vlaneseq
  %v1557 = vshrl.u32 %v1556, 7
  %v1558 = vsub.s32 1, %v1557
  %v1559 = vrot.slane %v1551, %v1558
  %vm1560 = vcmp.eq.s32.totalorder %v30, %v1555
  %vm1561 = vcmp.eq.s32.totalorder %v30, %v1559
  %vm1562 = vcmp.eq.s32.totalorder %v31, %v1555
  %vm1563 = vcmp.eq.s32.totalorder %v31, %v1559
  %vm1564 = vcmp.eq.s32.totalorder %v32, %v1555
  %vm1565 = vcmp.eq.s32.totalorder %v32, %v1559
  %vm1566 = vcmp.eq.s32.totalorder %v33, %v1555
  %vm1567 = vcmp.eq.s32.totalorder %v33, %v1559
  %vm1568 = vcmp.eq.s32.totalorder %v34, %v1555
  %vm1569 = vcmp.eq.s32.totalorder %v34, %v1559
  %vm1570 = vcmp.eq.s32.totalorder %v35, %v1555
  %vm1571 = vcmp.eq.s32.totalorder %v35, %v1559
  %vm1572 = vcmp.eq.s32.totalorder %v36, %v1555
  %vm1573 = vcmp.eq.s32.totalorder %v36, %v1559
  %vm1574 = vcmp.eq.s32.totalorder %v37, %v1555
  %vm1575 = vcmp.eq.s32.totalorder %v37, %v1559
  %v1576 = vsel %vm1560, 1.0, 0.0
  %v1577 = vsel %vm1561, 1.0, 0.0
  %v1578 = vsel %vm1562, 1.0, 0.0
  %v1579 = vsel %vm1563, 1.0, 0.0
  %v1580 = vsel %vm1564, 1.0, 0.0
  %v1581 = vsel %vm1565, 1.0, 0.0
  %v1582 = vsel %vm1566, 1.0, 0.0
  %v1583 = vsel %vm1567, 1.0, 0.0
  %v1584 = vsel %vm1568, 1.0, 0.0
  %v1585 = vsel %vm1569, 1.0, 0.0
  %v1586 = vsel %vm1570, 1.0, 0.0
  %v1587 = vsel %vm1571, 1.0, 0.0
  %v1588 = vsel %vm1572, 1.0, 0.0
  %v1589 = vsel %vm1573, 1.0, 0.0
  %v1590 = vsel %vm1574, 1.0, 0.0
  %v1591 = vsel %vm1575, 1.0, 0.0
  %v1592 = vld [vmem:[%s1 + $0x300] sm:$0xff]
  %v1593 = vld [vmem:[%s1 + $0x308] sm:$0xff]
  %v1594 = vld [vmem:[%s1 + $0x310] sm:$0xff]
  %v1595 = vld [vmem:[%s1 + $0x318] sm:$0xff]
  %v1596 = vld [vmem:[%s1 + $0x320] sm:$0xff]
  %v1597 = vld [vmem:[%s1 + $0x328] sm:$0xff]
  %v1598 = vld [vmem:[%s1 + $0x330] sm:$0xff]
  %v1599 = vld [vmem:[%s1 + $0x338] sm:$0xff]
  %v1600 = vld [vmem:[%s1 + $0x340] sm:$0xff]
  %v1601 = vld [vmem:[%s1 + $0x348] sm:$0xff]
  %v1602 = vld [vmem:[%s1 + $0x350] sm:$0xff]
  %v1603 = vld [vmem:[%s1 + $0x358] sm:$0xff]
  %v1604 = vld [vmem:[%s1 + $0x360] sm:$0xff]
  %v1605 = vld [vmem:[%s1 + $0x368] sm:$0xff]
  %v1606 = vld [vmem:[%s1 + $0x370] sm:$0xff]
  %v1607 = vld [vmem:[%s1 + $0x378] sm:$0xff]
  %v1608 = vld [vmem:[%s1 + $0x380] sm:$0xff]
  %v1609 = vld [vmem:[%s1 + $0x388] sm:$0xff]
  %v1610 = vld [vmem:[%s1 + $0x390] sm:$0xff]
  %v1611 = vld [vmem:[%s1 + $0x398] sm:$0xff]
  %v1612 = vld [vmem:[%s1 + $0x3a0] sm:$0xff]
  %v1613 = vld [vmem:[%s1 + $0x3a8] sm:$0xff]
  %v1614 = vld [vmem:[%s1 + $0x3b0] sm:$0xff]
  %v1615 = vld [vmem:[%s1 + $0x3b8] sm:$0xff]
  %v1616 = vld [vmem:[%s1 + $0x3c0] sm:$0xff]
  %v1617 = vld [vmem:[%s1 + $0x3c8] sm:$0xff]
  %v1618 = vld [vmem:[%s1 + $0x3d0] sm:$0xff]
  %v1619 = vld [vmem:[%s1 + $0x3d8] sm:$0xff]
  %v1620 = vld [vmem:[%s1 + $0x3e0] sm:$0xff]
  %v1621 = vld [vmem:[%s1 + $0x3e8] sm:$0xff]
  %v1622 = vld [vmem:[%s1 + $0x3f0] sm:$0xff]
  %v1623 = vld [vmem:[%s1 + $0x3f8] sm:$0xff]
  %1624 = vmatprep.subr.mxu0 0.0
  %1625 = vmatpush1.msra.mxu0 %v1607
  %1626 = vmatprep.subr.mxu0 0.0
  %1627 = vmatpush1.msra.mxu0 %v1606
  %1628 = vmatprep.subr.mxu0 0.0
  %1629 = vmatpush1.msra.mxu0 %v1605
  %1630 = vmatprep.subr.mxu0 0.0
  %1631 = vmatpush1.msra.mxu0 %v1604
  %1632 = vmatprep.subr.mxu0 0.0
  %1633 = vmatpush1.msra.mxu0 %v1603
  %1634 = vmatprep.subr.mxu0 0.0
  %1635 = vmatpush1.msra.mxu0 %v1602
  %1636 = vmatprep.subr.mxu0 0.0
  %1637 = vmatpush1.msra.mxu0 %v1601
  %1638 = vmatprep.subr.mxu0 0.0
  %1639 = vmatpush1.msra.mxu0 %v1600
  %1640 = vmatprep.subr.mxu0 0.0
  %1641 = vmatpush1.msra.mxu0 %v1599
  %1642 = vmatprep.subr.mxu0 0.0
  %1643 = vmatpush1.msra.mxu0 %v1598
  %1644 = vmatprep.subr.mxu0 0.0
  %1645 = vmatpush1.msra.mxu0 %v1597
  %1646 = vmatprep.subr.mxu0 0.0
  %1647 = vmatpush1.msra.mxu0 %v1596
  %1648 = vmatprep.subr.mxu0 0.0
  %1649 = vmatpush1.msra.mxu0 %v1595
  %1650 = vmatprep.subr.mxu0 0.0
  %1651 = vmatpush1.msra.mxu0 %v1594
  %1652 = vmatprep.subr.mxu0 0.0
  %1653 = vmatpush1.msra.mxu0 %v1593
  %1654 = vmatprep.subr.mxu0 0.0
  %1655 = vmatpush1.msra.mxu0 %v1592
  %1656 = vmatprep.subr.mxu0 0.0
  %1657 = vmatpush2.msra.mxu0 %v1623
  %1658 = vmatprep.subr.mxu0 0.0
  %1659 = vmatpush2.msra.mxu0 %v1622
  %1660 = vmatprep.subr.mxu0 0.0
  %1661 = vmatpush2.msra.mxu0 %v1621
  %1662 = vmatprep.subr.mxu0 0.0
  %1663 = vmatpush2.msra.mxu0 %v1620
  %1664 = vmatprep.subr.mxu0 0.0
  %1665 = vmatpush2.msra.mxu0 %v1619
  %1666 = vmatprep.subr.mxu0 0.0
  %1667 = vmatpush2.msra.mxu0 %v1618
  %1668 = vmatprep.subr.mxu0 0.0
  %1669 = vmatpush2.msra.mxu0 %v1617
  %1670 = vmatprep.subr.mxu0 0.0
  %1671 = vmatpush2.msra.mxu0 %v1616
  %1672 = vmatprep.subr.mxu0 0.0
  %1673 = vmatpush2.msra.mxu0 %v1615
  %1674 = vmatprep.subr.mxu0 0.0
  %1675 = vmatpush2.msra.mxu0 %v1614
  %1676 = vmatprep.subr.mxu0 0.0
  %1677 = vmatpush2.msra.mxu0 %v1613
  %1678 = vmatprep.subr.mxu0 0.0
  %1679 = vmatpush2.msra.mxu0 %v1612
  %1680 = vmatprep.subr.mxu0 0.0
  %1681 = vmatpush2.msra.mxu0 %v1611
  %1682 = vmatprep.subr.mxu0 0.0
  %1683 = vmatpush2.msra.mxu0 %v1610
  %1684 = vmatprep.subr.mxu0 0.0
  %1685 = vmatpush2.msra.mxu0 %v1609
  %1686 = vmatprep.subr.mxu0 0.0
  %1687 = vmatpush2.msra.mxu0 %v1608
  %1688 = vmatprep.mubr.f32.mxu0 %v1577
  %1689 = vmatmul.mubr.f32.gmra.mxu0 %v1576
  %v1690 = vpop.f32.mrf.mxu0
  %v1691 = vadd.f32 0.0, %v1690
  %v1692 = vpop.f32.mrf.mxu0
  %1693 = vmatprep.mubr.f32.mxu0 %v1579
  %1694 = vmatmul.mubr.f32.gmra.mxu0 %v1578
  %v1695 = vpop.f32.mrf.mxu0
  %v1696 = vadd.f32 0.0, %v1695
  %v1697 = vpop.f32.mrf.mxu0
  %1698 = vmatprep.mubr.f32.mxu0 %v1581
  %1699 = vmatmul.mubr.f32.gmra.mxu0 %v1580
  %v1700 = vpop.f32.mrf.mxu0
  %v1701 = vadd.f32 0.0, %v1700
  %v1702 = vpop.f32.mrf.mxu0
  %1703 = vmatprep.mubr.f32.mxu0 %v1583
  %1704 = vmatmul.mubr.f32.gmra.mxu0 %v1582
  %v1705 = vpop.f32.mrf.mxu0
  %v1706 = vadd.f32 0.0, %v1705
  %v1707 = vpop.f32.mrf.mxu0
  %1708 = vmatprep.mubr.f32.mxu0 %v1585
  %1709 = vmatmul.mubr.f32.gmra.mxu0 %v1584
  %v1710 = vpop.f32.mrf.mxu0
  %v1711 = vadd.f32 0.0, %v1710
  %v1712 = vpop.f32.mrf.mxu0
  %1713 = vmatprep.mubr.f32.mxu0 %v1587
  %1714 = vmatmul.mubr.f32.gmra.mxu0 %v1586
  %v1715 = vpop.f32.mrf.mxu0
  %v1716 = vadd.f32 0.0, %v1715
  %v1717 = vpop.f32.mrf.mxu0
  %1718 = vmatprep.mubr.f32.mxu0 %v1589
  %1719 = vmatmul.mubr.f32.gmra.mxu0 %v1588
  %v1720 = vpop.f32.mrf.mxu0
  %v1721 = vadd.f32 0.0, %v1720
  %v1722 = vpop.f32.mrf.mxu0
  %1723 = vmatprep.mubr.f32.mxu0 %v1591
  %1724 = vmatmul.mubr.f32.gmra.mxu0 %v1590
  %v1725 = vpop.f32.mrf.mxu0
  %v1726 = vadd.f32 0.0, %v1725
  %v1727 = vpop.f32.mrf.mxu0
  %1728 = vdwg.mxu0
  %v1729 = vadd.f32 %v1542, %v1691
  %v1730 = vadd.f32 %v1543, %v1696
  %v1731 = vadd.f32 %v1544, %v1701
  %v1732 = vadd.f32 %v1545, %v1706
  %v1733 = vadd.f32 %v1546, %v1711
  %v1734 = vadd.f32 %v1547, %v1716
  %v1735 = vadd.f32 %v1548, %v1721
  %v1736 = vadd.f32 %v1549, %v1726
  %1737 = vmatprep.subr.mxu0 0.0
  %1738 = vmatpush1.msra.mxu0 0.0
  %1739 = vmatprep.subr.mxu0 0.0
  %1740 = vmatpush1.msra.mxu0 0.0
  %1741 = vmatprep.subr.mxu0 0.0
  %1742 = vmatpush1.msra.mxu0 0.0
  %1743 = vmatprep.subr.mxu0 0.0
  %1744 = vmatpush1.msra.mxu0 0.0
  %1745 = vmatprep.subr.mxu0 0.0
  %1746 = vmatpush1.msra.mxu0 0.0
  %1747 = vmatprep.subr.mxu0 0.0
  %1748 = vmatpush1.msra.mxu0 0.0
  %1749 = vmatprep.subr.mxu0 0.0
  %1750 = vmatpush1.msra.mxu0 0.0
  %1751 = vmatprep.subr.mxu0 0.0
  %1752 = vmatpush1.msra.mxu0 0.0
  %1753 = vmatprep.subr.mxu0 0.0
  %1754 = vmatpush1.msra.mxu0 %v1736
  %1755 = vmatprep.subr.mxu0 0.0
  %1756 = vmatpush1.msra.mxu0 %v1735
  %1757 = vmatprep.subr.mxu0 0.0
  %1758 = vmatpush1.msra.mxu0 %v1734
  %1759 = vmatprep.subr.mxu0 0.0
  %1760 = vmatpush1.msra.mxu0 %v1733
  %1761 = vmatprep.subr.mxu0 0.0
  %1762 = vmatpush1.msra.mxu0 %v1732
  %1763 = vmatprep.subr.mxu0 0.0
  %1764 = vmatpush1.msra.mxu0 %v1731
  %1765 = vmatprep.subr.mxu0 0.0
  %1766 = vmatpush1.msra.mxu0 %v1730
  %1767 = vmatprep.subr.mxu0 0.0
  %1768 = vmatpush1.msra.mxu0 %v1729
  %1769 = vmatprep.subr.mxu0 0.0
  %1770 = vmatpush2.msra.mxu0 0.0
  %1771 = vmatprep.subr.mxu0 0.0
  %1772 = vmatpush2.msra.mxu0 0.0
  %1773 = vmatprep.subr.mxu0 0.0
  %1774 = vmatpush2.msra.mxu0 0.0
  %1775 = vmatprep.subr.mxu0 0.0
  %1776 = vmatpush2.msra.mxu0 0.0
  %1777 = vmatprep.subr.mxu0 0.0
  %1778 = vmatpush2.msra.mxu0 0.0
  %1779 = vmatprep.subr.mxu0 0.0
  %1780 = vmatpush2.msra.mxu0 0.0
  %1781 = vmatprep.subr.mxu0 0.0
  %1782 = vmatpush2.msra.mxu0 0.0
  %1783 = vmatprep.subr.mxu0 0.0
  %1784 = vmatpush2.msra.mxu0 0.0
  %1785 = vmatprep.subr.mxu0 0.0
  %1786 = vmatpush2.msra.mxu0 0.0
  %1787 = vmatprep.subr.mxu0 0.0
  %1788 = vmatpush2.msra.mxu0 0.0
  %1789 = vmatprep.subr.mxu0 0.0
  %1790 = vmatpush2.msra.mxu0 0.0
  %1791 = vmatprep.subr.mxu0 0.0
  %1792 = vmatpush2.msra.mxu0 0.0
  %1793 = vmatprep.subr.mxu0 0.0
  %1794 = vmatpush2.msra.mxu0 0.0
  %1795 = vmatprep.subr.mxu0 0.0
  %1796 = vmatpush2.msra.mxu0 0.0
  %1797 = vmatprep.subr.mxu0 0.0
  %1798 = vmatpush2.msra.mxu0 0.0
  %1799 = vmatprep.subr.mxu0 0.0
  %1800 = vmatpush2.msra.mxu0 0.0
  %1801 = vmatprep.mubr.f32.mxu0 0.0
  %1802 = vmatmul.mubr.f32.gmra.mxu0 %v771
  %v1803 = vpop.f32.mrf.mxu0
  %v1804 = vadd.f32 0.0, %v1803
  %v1805 = vpop.f32.mrf.mxu0
  %1806 = vmatprep.mubr.f32.mxu0 0.0
  %1807 = vmatmul.mubr.f32.gmra.mxu0 %v774
  %v1808 = vpop.f32.mrf.mxu0
  %v1809 = vadd.f32 0.0, %v1808
  %v1810 = vpop.f32.mrf.mxu0
  %1811 = vmatprep.mubr.f32.mxu0 0.0
  %1812 = vmatmul.mubr.f32.gmra.mxu0 %v777
  %v1813 = vpop.f32.mrf.mxu0
  %v1814 = vadd.f32 0.0, %v1813
  %v1815 = vpop.f32.mrf.mxu0
  %1816 = vdwg.mxu0
  %v1820 = vrot.slane %v1804, 1
  %v1821 = vrot.slane %v1809, 1
  %v1822 = vsel %vm862, %v1820, %v1821
  %v1823 = vrot.slane %v1814, 1
  %v1824 = vsel %vm862, %v1821, %v1823
  %1825 = vrot.lane.b32.xlu0 %v1822, 120
  %v1826 = vpop.permute.xlu0 %1825
  %1827 = vrot.lane.b32.xlu0 %v1824, 120
  %v1828 = vpop.permute.xlu0 %1827
  %v1831 = vadd.f32 %v1804, %v1826
  %v1832 = vadd.f32 %v1809, %v1828
  %v1833 = vrot.slane %v1804, 2
  %v1834 = vrot.slane %v1809, 2
  %v1835 = vsel %vm876, %v1833, %v1834
  %v1836 = vrot.slane %v1814, 2
  %v1837 = vsel %vm876, %v1834, %v1836
  %1838 = vrot.lane.b32.xlu0 %v1835, 112
  %v1839 = vpop.permute.xlu0 %1838
  %1840 = vrot.lane.b32.xlu0 %v1837, 112
  %v1841 = vpop.permute.xlu0 %1840
  %v1844 = vadd.f32 %v1831, %v1839
  %v1845 = vadd.f32 %v1832, %v1841
  %v1846 = vadd.f32 %v1844, %v894
  %v1847 = vadd.f32 %v1845, %v894
  %v1848 = vmax.f32 %v1846, 0.0
  %v1849 = vmax.f32 %v1847, 0.0
  %v1852 = vrot.slane %v1848, 1
  %v1853 = vrot.slane %v1849, 1
  %v1854 = vsel %vm862, %v1852, %v1853
  %v1857 = vmax.f32 %v1848, %v1854
  %v1858 = vmax.f32 %v1849, %v1853
  %v1859 = vrot.slane %v1848, 2
  %v1860 = vrot.slane %v1849, 2
  %v1861 = vsel %vm876, %v1859, %v1860
  %v1864 = vmax.f32 %v1857, %v1861
  %v1865 = vmax.f32 %v1858, %v1860
  %v1867 = vsel %vm876, %v1865, 0
  %1869 = vmatprep.subr.mxu0 0.0
  %1870 = vmatpush1.msra.mxu0 0.0
  %1871 = vmatprep.subr.mxu0 0.0
  %1872 = vmatpush1.msra.mxu0 0.0
  %1873 = vmatprep.subr.mxu0 0.0
  %1874 = vmatpush1.msra.mxu0 0.0
  %1875 = vmatprep.subr.mxu0 0.0
  %1876 = vmatpush1.msra.mxu0 0.0
  %1877 = vmatprep.subr.mxu0 0.0
  %1878 = vmatpush1.msra.mxu0 0.0
  %1879 = vmatprep.subr.mxu0 0.0
  %1880 = vmatpush1.msra.mxu0 0.0
  %1881 = vmatprep.subr.mxu0 0.0
  %1882 = vmatpush1.msra.mxu0 0.0
  %1883 = vmatprep.subr.mxu0 0.0
  %1884 = vmatpush1.msra.mxu0 0.0
  %1885 = vmatprep.subr.mxu0 0.0
  %1886 = vmatpush1.msra.mxu0 0.0
  %1887 = vmatprep.subr.mxu0 0.0
  %1888 = vmatpush1.msra.mxu0 0.0
  %1889 = vmatprep.subr.mxu0 0.0
  %1890 = vmatpush1.msra.mxu0 0.0
  %1891 = vmatprep.subr.mxu0 0.0
  %1892 = vmatpush1.msra.mxu0 0.0
  %1893 = vmatprep.subr.mxu0 0.0
  %1894 = vmatpush1.msra.mxu0 0.0
  %1895 = vmatprep.subr.mxu0 0.0
  %1896 = vmatpush1.msra.mxu0 0.0
  %1897 = vmatprep.subr.mxu0 0.0
  %1898 = vmatpush1.msra.mxu0 %v1867
  %1899 = vmatprep.subr.mxu0 0.0
  %1900 = vmatpush1.msra.mxu0 %v1864
  %1901 = vmatprep.subr.mxu0 0.0
  %1902 = vmatpush2.msra.mxu0 0.0
  %1903 = vmatprep.subr.mxu0 0.0
  %1904 = vmatpush2.msra.mxu0 0.0
  %1905 = vmatprep.subr.mxu0 0.0
  %1906 = vmatpush2.msra.mxu0 0.0
  %1907 = vmatprep.subr.mxu0 0.0
  %1908 = vmatpush2.msra.mxu0 0.0
  %1909 = vmatprep.subr.mxu0 0.0
  %1910 = vmatpush2.msra.mxu0 0.0
  %1911 = vmatprep.subr.mxu0 0.0
  %1912 = vmatpush2.msra.mxu0 0.0
  %1913 = vmatprep.subr.mxu0 0.0
  %1914 = vmatpush2.msra.mxu0 0.0
  %1915 = vmatprep.subr.mxu0 0.0
  %1916 = vmatpush2.msra.mxu0 0.0
  %1917 = vmatprep.subr.mxu0 0.0
  %1918 = vmatpush2.msra.mxu0 0.0
  %1919 = vmatprep.subr.mxu0 0.0
  %1920 = vmatpush2.msra.mxu0 0.0
  %1921 = vmatprep.subr.mxu0 0.0
  %1922 = vmatpush2.msra.mxu0 0.0
  %1923 = vmatprep.subr.mxu0 0.0
  %1924 = vmatpush2.msra.mxu0 0.0
  %1925 = vmatprep.subr.mxu0 0.0
  %1926 = vmatpush2.msra.mxu0 0.0
  %1927 = vmatprep.subr.mxu0 0.0
  %1928 = vmatpush2.msra.mxu0 0.0
  %1929 = vmatprep.subr.mxu0 0.0
  %1930 = vmatpush2.msra.mxu0 0.0
  %1931 = vmatprep.subr.mxu0 0.0
  %1932 = vmatpush2.msra.mxu0 0.0
  %1933 = vmatprep.mubr.f32.mxu0 0.0
  %1934 = vmatmul.mubr.f32.gmra.mxu0 %v923
  %v1935 = vpop.f32.mrf.mxu0
  %v1936 = vadd.f32 %v919, %v1935
  %v1937 = vpop.f32.mrf.mxu0
  %1938 = vdwg.mxu0
  %v1939 = vsub.f32 0.0, %v1936
  %v1940 = vmul.f32 %v1939, 1.442695
  %v1941 = vpow.pop %v1940
  %v1942 = vadd.f32 %v1941, 1.0
  %v1943 = vrcp.pop %v1942
  %s1944 = scalar_lea.vmem %s6, 4
  %1945 = vst.msk [vmem:[%s1944] sm:$0x7] %vm1003, %v1943
  // Predicated region
  $region26: #{cnn_fixed_len_forward.1} parent=0 // pred_check
    _
  $region27: #{cnn_fixed_len_forward.1} parent=0 // pred_check_branch
    %1947 = sbr.rel (0) target = $region29
  $region28: #{cnn_fixed_len_forward.1} parent=0 // pred_region
    _
  $region29: #{cnn_fixed_len_forward.1} parent=0 // pred_fallthru
    _
  // Predicated region
  $region30: #{cnn_fixed_len_forward.1} parent=0 // pred_check
    _
  $region31: #{cnn_fixed_len_forward.1} parent=0 // pred_check_branch
    %1949 = sbr.rel (0) target = $region33
  $region32: #{cnn_fixed_len_forward.1} parent=0 // pred_region
    _
  $region33: #{cnn_fixed_len_forward.1} parent=0 // pred_fallthru
    _

</llo_original>
